<compile_context>
chip_gen: v5e
topology: v5e:2x2
jax: 0.10.0
libtpu: 0.0.40
codegen_flags: <defaults>
</compile_context>

<pallas_src>
import functools

import jax
import jax.numpy as jnp
from jax.experimental import pallas as pl
from jax.experimental.pallas import tpu as pltpu

HIDDEN = 512
ETA_DIM = 12
IN_CH = 8      # 3 coord + 3 feat + 1 constant-one (bias) + 1 zero pad


def _round_up(x, m):
    return ((x + m - 1) // m) * m


# ---------------------------------------------------------------------------
# Kernel: fused (optional rigid transform) + layer-1 MLP + segment-sum pooling
#   per tile: x8' = per-segment R,t applied to coord rows (optional)
#             h   = relu(W1aug @ x8')            (MXU, K=8, f32)
#             out[:, s] += sum_{p in seg s} h[:, p]   (bf16 MXU matmul)
# ---------------------------------------------------------------------------
def _feat_pool_kernel(num_seg, tile_n, with_transform, offsets_ref,
                      x6_ref, w1t_ref, *rest):
    if with_transform:
        gt_ref, out_ref = rest
    else:
        (out_ref,) = rest

    # Output block is resident across the (arbitrary) point-tile axis.
    @pl.when(pl.program_id(1) == 0)
    def _init():
        out_ref[...] = jnp.zeros_like(out_ref)

    base = (pl.program_id(0) * pl.num_programs(1) + pl.program_id(1)) * tile_n
    x6 = x6_ref[...]                                   # (8, tile) f32, ch-first

    if with_transform:
        # Fused per-segment rigid transform of the coordinate rows
        # (replaces the standalone, memory-bound transform_points kernel).
        col = jax.lax.broadcasted_iota(jnp.int32, (1, tile_n), 1) + base
        seg_l = jnp.zeros((1, tile_n), jnp.int32)
        for b in range(num_seg):
            seg_l = seg_l + (col >= offsets_ref[b]).astype(jnp.int32)
        gt = gt_ref[...]                               # (12, num_seg) f32
        coeff = jnp.zeros((12, tile_n), jnp.float32)
        for b in range(num_seg):
            sel = (seg_l == b).astype(jnp.float32)     # (1, tile)
            coeff = coeff + gt[:, b:b + 1] * sel       # broadcast FMA
        rows = []
        for j in range(3):
            y = coeff[9 + j:10 + j, :]                 # t_j per point
            for k in range(3):
                y = y + coeff[3 * j + k:3 * j + k + 1, :] * x6[k:k + 1, :]
            rows.append(y)
        x6 = jnp.concatenate(rows + [x6[3:8, :]], axis=0)   # (8, tile)

    # Layer 1 on the MXU; row 6 of x6 is the constant-1 bias row so b1 is
    # already folded into w1t.  f32 operands keep input precision (K is 8).
    h = jnp.maximum(jnp.dot(w1t_ref[...], x6,
                            preferred_element_type=jnp.float32), 0.0)
    # h: (HIDDEN, tile) f32

    # Per-point one-hot segment matrix, points on sublanes; exact in bf16.
    row = jax.lax.broadcasted_iota(jnp.int32, (tile_n, 1), 0) + base
    seg_s = jnp.zeros((tile_n, 1), jnp.int32)
    for b in range(num_seg):
        seg_s = seg_s + (row >= offsets_ref[b]).astype(jnp.int32)
    onehot = (jax.lax.broadcasted_iota(jnp.int32, (tile_n, num_seg), 1)
              == seg_s).astype(jnp.bfloat16)           # padding rows: all-zero

    # Pool-then-project: only segment sums of relu(h) are accumulated here;
    # W2 / W_out are applied once to the pooled means outside the kernel.
    out_ref[...] += jnp.dot(h.astype(jnp.bfloat16), onehot,
                            preferred_element_type=jnp.float32)


def point_feat_head(params, x0, feat0, offset0, x1, feat1, offset1,
                    g0=None, tile_n=2048, n_splits=2):
    """Surrogate backbone + matcher head for both clouds.  Returns eta (B, 12).

    `g0`, if given, is a (B, 4, 4) rigid transform applied to cloud-0 points
    inside the kernel (fused replacement for a standalone transform pass).
    Offsets must be strictly increasing cumulative end indices with
    offsets[-1] == number of points of that cloud.
    """
    b = offset0.shape[0]
    assert offset1.shape[0] == b
    num_seg = 2 * b
    n0, n1 = x0.shape[0], x1.shape[0]
    n = n0 + n1

    # tile_n=2048: ~8 MiB/step incl. the f32/bf16 h temporaries and double
    # buffers -> fits the default scoped VMEM on v5e/v6e/v7x (4096 also fits).
    tile = max(128, min(tile_n, _round_up(-(-n // n_splits), 128)))
    n_pad = _round_up(n, tile * n_splits)
    tiles_per_split = n_pad // (tile * n_splits)

    # Merged cumulative offset table for both clouds.
    offsets = jnp.concatenate(
        [offset0.astype(jnp.int32), offset1.astype(jnp.int32) + n0], axis=0)

    # Single channels-first packing pass (rows: coord x3, feat x3, ones, zeros).
    cloud = jnp.concatenate(
        [jnp.concatenate([x0, feat0], axis=1),
         jnp.concatenate([x1, feat1], axis=1)], axis=0).astype(jnp.float32)
    packed = jnp.concatenate(
        [cloud, jnp.ones((n, 1), jnp.float32), jnp.zeros((n, 1), jnp.float32)],
        axis=1)                                              # (n, 8)
    x6 = jnp.pad(packed, ((0, n_pad - n), (0, 0))).T         # (8, n_pad)

    # W1 augmented with the bias row and one zero row -> (HIDDEN, 8).
    w1t = jnp.concatenate(
        [params["w1"], params["b1"], jnp.zeros((1, HIDDEN), jnp.float32)],
        axis=0).T.astype(jnp.float32)

    with_transform = g0 is not None
    extra = []
    in_specs = [
        pl.BlockSpec((IN_CH, tile),
                     lambda c, i, off: (0, c * tiles_per_split + i)),
        pl.BlockSpec((HIDDEN, IN_CH), lambda c, i, off: (0, 0)),
    ]
    if with_transform:
        def _coeff(g):   # (B, 4, 4) -> (B, 12): [R00..R22, t0, t1, t2]
            return jnp.concatenate(
                [g[:, :3, :3].reshape(-1, 9), g[:, :3, 3]], axis=1)
        ident = jnp.tile(jnp.eye(4, dtype=jnp.float32)[None], (b, 1, 1))
        gt = jnp.concatenate([_coeff(g0.astype(jnp.float32)), _coeff(ident)],
                             axis=0).T                       # (12, num_seg)
        extra = [gt]
        in_specs.append(pl.BlockSpec((12, num_seg), lambda c, i, off: (0, 0)))

    kernel = functools.partial(_feat_pool_kernel, num_seg, tile, with_transform)
    pooled = pl.pallas_call(
        kernel,
        out_shape=jax.ShapeDtypeStruct((n_splits, HIDDEN, num_seg),
                                       jnp.float32),
        grid_spec=pltpu.PrefetchScalarGridSpec(
            num_scalar_prefetch=1,
            grid=(n_splits, tiles_per_split),       # reduction axis is last
            in_specs=in_specs,
            out_specs=pl.BlockSpec((None, HIDDEN, num_seg),
                                   lambda c, i, off: (c, 0, 0)),
        ),
        compiler_params=pltpu.CompilerParams(
            # leading axis feeds both TensorCores on v7x; the inner axis is the
            # per-core running reduction over point tiles.
            dimension_semantics=("parallel", "arbitrary")),
    )(offsets, x6, w1t, *extra)                 # (n_splits, HIDDEN, num_seg)

    # Tiny epilogue in plain JAX: combine partial sums, counts from offsets,
    # then W2 (+b2) and W_out applied once to the pooled means (linearity).
    sums = jnp.sum(pooled, axis=0)                           # (HIDDEN, num_seg)
    off_f = offsets.astype(jnp.float32)
    cnt = off_f - jnp.concatenate([jnp.zeros((1,), jnp.float32), off_f[:-1]])
    mean = (sums / jnp.maximum(cnt, 1.0)[None, :]).T         # (num_seg, HIDDEN)
    f = mean @ params["w2"] + params["b2"]                   # (num_seg, HIDDEN)
    eta = (f[b:] - f[:b]) @ params["w_out"] + params["b_out"]
    return eta


# ---------------------------------------------------------------------------
# Plain-JAX glue (tiny 4x4 algebra, exactly mirrors the PyTorch code)
# ---------------------------------------------------------------------------
def eta2g(eta):
    b = eta.shape[0]
    g = jnp.tile(jnp.eye(4, dtype=eta.dtype)[None], (b, 1, 1))
    g = g.at[:, :3, :3].set(eta[:, :9].reshape(b, 3, 3))
    g = g.at[:, :3, 3].set(eta[:, 9:])
    return g


def point_matcher_forward(params, x0, feat0, offset0, x1, feat1, offset1,
                          max_inter=1):
    b = offset0.shape[0]
    g_merge = jnp.tile(jnp.eye(4, dtype=jnp.float32)[None], (b, 1, 1))
    g_cum = None   # composed transform applied (inside kernel 1) to cloud 0
    for _ in range(max_inter):
        eta = point_feat_head(params, x0, feat0, offset0, x1, feat1, offset1,
                              g0=g_cum)
        g = eta2g(eta)                                       # (B, 4, 4)
        g_merge = jnp.einsum("bij,bjk->bik", g, g_merge)
        # PyTorch's per-iteration x0 <- g . x0 is kept as a composed transform
        # that is applied to the original points inside the next kernel call.
        g_cum = g if g_cum is None else jnp.einsum("bij,bjk->bik", g, g_cum)
    return g_merge


def init_params(key):
    k1, k2, k3 = jax.random.split(key, 3)
    return {
        "w1": jax.random.normal(k1, (6, HIDDEN), jnp.float32) * 0.1,
        "b1": jnp.zeros((1, HIDDEN), jnp.float32),
        "w2": jax.random.normal(k2, (HIDDEN, HIDDEN), jnp.float32)
              * (HIDDEN ** -0.5),
        "b2": jnp.zeros((1, HIDDEN), jnp.float32),
        "w_out": jax.random.normal(k3, (HIDDEN, ETA_DIM), jnp.float32) * 0.01,
        "b_out": jnp.zeros((1, ETA_DIM), jnp.float32),
    }


def _feat_head_ref(params, x0, feat0, offset0, x1, feat1, offset1):
    """Pure-JAX (f32) reference of the surrogate backbone + head."""
    def backbone(x, feat, off):
        h = jnp.maximum(
            jnp.concatenate([x, feat], axis=1) @ params["w1"] + params["b1"],
            0.0)
        f = h @ params["w2"] + params["b2"]
        means, prev = [], 0
        for i in range(off.shape[0]):
            end = int(off[i])
            means.append(jnp.mean(f[prev:end], axis=0))
            prev = end
        return jnp.stack(means)
    f0 = backbone(x0, feat0, offset0)
    f1 = backbone(x1, feat1, offset1)
    return (f1 - f0) @ params["w_out"] + params["b_out"]


if __name__ == "__main__":
    key = jax.random.PRNGKey(0)
    kp, kd = jax.random.split(key)
    params = init_params(kp)

    B = 2
    pts_per_batch = 16
    N = B * pts_per_batch
    k0, k1, k2, k3 = jax.random.split(kd, 4)
    x0 = jax.random.normal(k0, (N, 3), jnp.float32)      # coords, cloud 0
    feat0 = jax.random.normal(k1, (N, 3), jnp.float32)   # extra feats, cloud 0
    x1 = jax.random.normal(k2, (N, 3), jnp.float32)      # coords, cloud 1
    feat1 = jax.random.normal(k3, (N, 3), jnp.float32)   # extra feats, cloud 1
    offset0 = jnp.array([pts_per_batch, N], dtype=jnp.int32)
    offset1 = jnp.array([pts_per_batch, N], dtype=jnp.int32)

    # Kernel vs pure-JAX reference (bf16 pooling -> tolerance, not bit-exact).
    eta = jax.block_until_ready(
        point_feat_head(params, x0, feat0, offset0, x1, feat1, offset1))
    eta_ref = _feat_head_ref(params, x0, feat0, offset0, x1, feat1, offset1)
    assert eta.shape == (B, ETA_DIM)
    assert jnp.allclose(eta, eta_ref, rtol=5e-2, atol=2e-2), (eta, eta_ref)

    # Forward pass with the module default max_inter == 1.
    g_merge = jax.block_until_ready(
        point_matcher_forward(params, x0, feat0, offset0, x1, feat1, offset1))
    assert g_merge.shape == (B, 4, 4) and g_merge.dtype == jnp.float32

    # Exercise the fused per-segment rigid-transform path (max_inter > 1).
    g2 = jax.block_until_ready(
        point_matcher_forward(params, x0, feat0, offset0, x1, feat1, offset1,
                              max_inter=2))
    assert g2.shape == (B, 4, 4)

    print("KERNEL_OK")
</pallas_src>

<mosaic_0001>
module attributes {stable_mosaic.version = 11 : i64} {
  func.func @_feat_pool_kernel(%arg0: i32, %arg1: i32, %arg2: memref<4xi32, #tpu.memory_space<smem>>, %arg3: memref<8x128xf32, #tpu.memory_space<vmem>>, %arg4: memref<512x8xf32, #tpu.memory_space<vmem>>, %arg5: memref<1x512x4xf32, #tpu.memory_space<vmem>>) attributes {dimension_semantics = [#tpu.dimension_semantics<parallel>, #tpu.dimension_semantics<arbitrary>], iteration_bounds = array<i64: 2, 1>, scalar_prefetch = 1 : i64, scratch_operands = 0 : i64, tpu.core_type = #tpu.core_type<tc>, window_params = [{transform_indices = @transform_0, window_bounds = array<i64: 8, 128>}, {pipeline_mode = #tpu.pipeline_mode<synchronous>, transform_indices = @transform_1, window_bounds = array<i64: 512, 8>}, {transform_indices = @transform_2, window_bounds = array<i64: 1, 512, 4>}]} {
    %c0_i32 = arith.constant 0 : i32
    %0 = arith.cmpi eq, %arg1, %c0_i32 : i32
    %1 = arith.extui %0 : i1 to i32
    %c0_i32_0 = arith.constant 0 : i32
    %2 = arith.cmpi ne, %1, %c0_i32_0 : i32
    scf.if %2 {
      %cst_14 = arith.constant 0.000000e+00 : f32
      %49 = vector.broadcast %cst_14 : f32 to vector<512x4xf32>
      %c0_15 = arith.constant 0 : index
      %c0_16 = arith.constant 0 : index
      %c0_17 = arith.constant 0 : index
      %50 = vector.load %arg5[%c0_15, %c0_16, %c0_17] : memref<1x512x4xf32, #tpu.memory_space<vmem>>, vector<1x512x4xf32>
      %51 = vector.shape_cast %50 : vector<1x512x4xf32> to vector<512x4xf32>
      %52 = vector.shape_cast %49 : vector<512x4xf32> to vector<1x512x4xf32>
      tpu.vector_store %arg5[%c0_15, %c0_16, %c0_17], %52 {strides = array<i32>} : memref<1x512x4xf32, #tpu.memory_space<vmem>>, vector<1x512x4xf32>,
    } else {
    }
    %c1_i32 = arith.constant 1 : i32
    %3 = arith.muli %arg0, %c1_i32 : i32
    %4 = arith.addi %3, %arg1 : i32
    %c128_i32 = arith.constant 128 : i32
    %5 = arith.muli %4, %c128_i32 : i32
    %c0 = arith.constant 0 : index
    %c0_1 = arith.constant 0 : index
    %6 = vector.load %arg3[%c0, %c0_1] : memref<8x128xf32, #tpu.memory_space<vmem>>, vector<8x128xf32>
    %c0_2 = arith.constant 0 : index
    %c0_3 = arith.constant 0 : index
    %7 = vector.load %arg4[%c0_2, %c0_3] : memref<512x8xf32, #tpu.memory_space<vmem>>, vector<512x8xf32>
    %cst = arith.constant dense<0.000000e+00> : vector<512x128xf32>
    %8 = tpu.matmul %7, %6, %cst {dimension_numbers = #tpu.dot_dimension_numbers<[1], [0], [0], [1], [0, 0, 1, 1], [], []>} : vector<512x8xf32>, vector<8x128xf32>, vector<512x128xf32> -> vector<512x128xf32>
    %cst_4 = arith.constant 0.000000e+00 : f32
    %9 = vector.broadcast %cst_4 : f32 to vector<512x128xf32>
    %10 = arith.maximumf %8, %9 : vector<512x128xf32>
    %11 = tpu.iota {dimensions = array<i32: 0>} : vector<128x1xi32>
    %12 = vector.broadcast %5 : i32 to vector<128x1xi32>
    %13 = arith.addi %11, %12 : vector<128x1xi32>
    %c0_i32_5 = arith.constant 0 : i32
    %14 = vector.broadcast %c0_i32_5 : i32 to vector<128x1xi32>
    %c0_6 = arith.constant 0 : index
    %15 = memref.load %arg2[%c0_6] : memref<4xi32, #tpu.memory_space<smem>>
    %16 = vector.broadcast %15 : i32 to vector<128x1xi32>
    %17 = arith.cmpi sge, %13, %16 : vector<128x1xi32>
    %18 = arith.extui %17 : vector<128x1xi1> to vector<128x1xi32>
    %19 = arith.addi %14, %18 : vector<128x1xi32>
    %c1 = arith.constant 1 : index
    %20 = memref.load %arg2[%c1] : memref<4xi32, #tpu.memory_space<smem>>
    %21 = vector.broadcast %20 : i32 to vector<128x1xi32>
    %22 = arith.cmpi sge, %13, %21 : vector<128x1xi32>
    %23 = arith.extui %22 : vector<128x1xi1> to vector<128x1xi32>
    %24 = arith.addi %19, %23 : vector<128x1xi32>
    %c2 = arith.constant 2 : index
    %25 = memref.load %arg2[%c2] : memref<4xi32, #tpu.memory_space<smem>>
    %26 = vector.broadcast %25 : i32 to vector<128x1xi32>
    %27 = arith.cmpi sge, %13, %26 : vector<128x1xi32>
    %28 = arith.extui %27 : vector<128x1xi1> to vector<128x1xi32>
    %29 = arith.addi %24, %28 : vector<128x1xi32>
    %c3 = arith.constant 3 : index
    %30 = memref.load %arg2[%c3] : memref<4xi32, #tpu.memory_space<smem>>
    %31 = vector.broadcast %30 : i32 to vector<128x1xi32>
    %32 = arith.cmpi sge, %13, %31 : vector<128x1xi32>
    %33 = arith.extui %32 : vector<128x1xi1> to vector<128x1xi32>
    %34 = arith.addi %29, %33 : vector<128x1xi32>
    %35 = tpu.iota {dimensions = array<i32: 1>} : vector<128x4xi32>
    %36 = vector.broadcast %34 : vector<128x1xi32> to vector<128x4xi32>
    %37 = arith.cmpi eq, %35, %36 : vector<128x4xi32>
    %38 = arith.extui %37 : vector<128x4xi1> to vector<128x4xi32>
    %39 = arith.sitofp %38 : vector<128x4xi32> to vector<128x4xf32>
    %40 = arith.truncf %39 : vector<128x4xf32> to vector<128x4xbf16>
    %c0_7 = arith.constant 0 : index
    %c0_8 = arith.constant 0 : index
    %c0_9 = arith.constant 0 : index
    %41 = vector.load %arg5[%c0_7, %c0_8, %c0_9] : memref<1x512x4xf32, #tpu.memory_space<vmem>>, vector<1x512x4xf32>
    %42 = vector.shape_cast %41 : vector<1x512x4xf32> to vector<512x4xf32>
    %43 = arith.truncf %10 : vector<512x128xf32> to vector<512x128xbf16>
    %cst_10 = arith.constant dense<0.000000e+00> : vector<512x4xf32>
    %44 = tpu.matmul %43, %40, %cst_10 {dimension_numbers = #tpu.dot_dimension_numbers<[1], [0], [0], [1], [0, 0, 1, 1], [], []>} : vector<512x128xbf16>, vector<128x4xbf16>, vector<512x4xf32> -> vector<512x4xf32>
    %45 = arith.addf %42, %44 : vector<512x4xf32>
    %c0_11 = arith.constant 0 : index
    %c0_12 = arith.constant 0 : index
    %c0_13 = arith.constant 0 : index
    %46 = vector.load %arg5[%c0_11, %c0_12, %c0_13] : memref<1x512x4xf32, #tpu.memory_space<vmem>>, vector<1x512x4xf32>
    %47 = vector.shape_cast %46 : vector<1x512x4xf32> to vector<512x4xf32>
    %48 = vector.shape_cast %45 : vector<512x4xf32> to vector<1x512x4xf32>
    tpu.vector_store %arg5[%c0_11, %c0_12, %c0_13], %48 {strides = array<i32>} : memref<1x512x4xf32, #tpu.memory_space<vmem>>, vector<1x512x4xf32>,
    return
  }
  func.func @transform_0(%arg0: i32, %arg1: i32, %arg2: memref<4xi32, #tpu.memory_space<smem>>) -> (i32, i32) {
    %c1_i32 = arith.constant 1 : i32
    %0 = arith.muli %arg0, %c1_i32 : i32
    %1 = arith.addi %0, %arg1 : i32
    %c0_i32 = arith.constant 0 : i32
    %c0_i32_0 = arith.constant 0 : i32
    return %c0_i32, %1 : i32, i32
  }
  func.func @transform_1(%arg0: i32, %arg1: i32, %arg2: memref<4xi32, #tpu.memory_space<smem>>) -> (i32, i32) {
    %c0_i32 = arith.constant 0 : i32
    %c0_i32_0 = arith.constant 0 : i32
    %c0_i32_1 = arith.constant 0 : i32
    return %c0_i32, %c0_i32_0 : i32, i32
  }
  func.func @transform_2(%arg0: i32, %arg1: i32, %arg2: memref<4xi32, #tpu.memory_space<smem>>) -> (i32, i32, i32) {
    %c0_i32 = arith.constant 0 : i32
    %c0_i32_0 = arith.constant 0 : i32
    %c0_i32_1 = arith.constant 0 : i32
    return %arg0, %c0_i32, %c0_i32_0 : i32, i32, i32
  }
}

</mosaic_0001>

<llo_original>
// kernel: tpu_custom_call.1
$region0: #{tpu_custom_call.1}
  #allocation0 [shape = 'u32[]', space=smem, size = 0x4, offset = 0x4, fixed_abs, tag = 'smem constant byte address 0x4 - core index']
  #allocation1 [shape = 'u32[72,128]{1,0:T(1,128)}', space=vmem, size = 0x9000, scoped, tag = 'internal scratch']
  #allocation2 [shape = 's32[1]{0}', space=sflag, size = 0x4, scoped, tag = 'scoped memory for tpu_custom_call.1']
  #allocation3 [shape = 'u8[512]{0}', space=smem, size = 0x200, scoped, tag = 'prefetched SMEM operand 0']
  %s0 = inlined_call_operand.vmem [shape: s32[4], index: 0, kind: input, shape index: {}]
  %s1 = inlined_call_operand.vmem [shape: f32[8,256], index: 1, kind: input, shape index: {}]
  %s2 = inlined_call_operand.vmem [shape: f32[512,8], index: 2, kind: input, shape index: {}]
  %s3 = inlined_call_operand.vmem [shape: f32[2,512,4], index: 3, kind: output, shape index: {}]
  %s4 = sld [smem:[#allocation0]]
  $region45: #{tpu_custom_call.1} parent=0
    _
  %s6 = ssub.s32 1, %s4
  %s7 = scalar_select 0, %s6, %s4
  %s9 = sshll.u32 %s0, 4
  %s10 = int_to_ptr.vmem [resolvable:$true] %s9
  %12 = dma.vmem_to_smem %s10, 16, [#allocation3], [#allocation2]
  %14 = dma.done [#allocation2], 16
  %15 = sfence
  loop: start=0, step=1, limit=4
  $region2: #{tpu_custom_call.1} parent=0 // loop_pre_header
    _
  $region3: #{tpu_custom_call.1} parent=0 // loop_header
    %s17 = sphi 0, %s21
    %p18 = scmp.ge.s32.totalorder %s17, 4
    %s24 = sphi 0, %s36
    %s25 = sphi 0, %s32
    %s26 = sphi 0, %s24
    %s27 = sphi 0, %s25
    %s28 = sphi 0, %s26
    %s29 = sphi 0, %s27
    %s41 = sphi 0, %s43
    %s44 = sphi 0, %s41
    %s45 = sphi 0, %s44
    %s61 = sphi 0, %s45
    %s65 = sphi 0, %s65
    %s67 = sphi 0, %s65
    %s68 = sphi 0, %s67
    %s82 = sphi 0, %s68
    %s88 = sphi 0, %s90
    %s91 = sphi 0, %s88
    %s92 = sphi 0, %s91
    %s108 = sphi 0, %s92
  $region4: #{tpu_custom_call.1} parent=0 // loop_header_branch
    %20 = sbr.rel (%p18) target = $region8
  $region5: #{tpu_custom_call.1} parent=0 // loop_body
    %s22 = ssub.s32 %s17, 1
    %s23 = ssub.s32 %s17, 2
    %s30 = sadd.s32 1, %s25
    %p31 = scmp.ge.s32.totalorder %s30, 1
    %s32 = scalar_select %p31, 0, %s30
    %s33 = sadd.s32 1, %s24
    %s34 = scalar_select %p31, %s33, %s24
    %p35 = scmp.ge.s32.totalorder %s34, 2
    %s36 = scalar_select %p35, 0, %s34
    %s37 = sadd.s32 %s24, %s25
    %s38 = sadd.s32 %s36, %s32
    %s39 = ssub.s32 %s37, %s38
    %p40 = scmp.eq.s32.totalorder %s39, 0
    %s42 = sadd.s32 %s41, 1
    %s43 = scalar_select %p40, %s41, %s42
    %p46 = pneg %p40
    %p47 = scmp.eq.s32.totalorder %s17, 1
    %p48 = por %p46, %p47
    %p49 = scmp.ne.s32.totalorder %s41, %s44
    %p50 = scmp.eq.s32.totalorder %s17, 0
    %p51 = por %p49, %p50
    %p52 = scmp.ne.s32.totalorder %s41, %s44
    %p53 = scmp.eq.s32.totalorder %s22, 1
    %p54 = por %p52, %p53
    %p55 = scmp.ne.s32.totalorder %s44, %s45
    %p56 = scmp.eq.s32.totalorder %s22, 0
    %p57 = por %p55, %p56
    %p58 = scmp.ne.s32.totalorder %s44, %s45
    %p59 = scmp.eq.s32.totalorder %s23, 1
    %p60 = por %p58, %p59
    %p62 = scmp.ne.s32.totalorder %s45, %s61
    %p63 = scmp.eq.s32.totalorder %s23, 0
    %p64 = por %p62, %p63
    %s66 = sadd.s32 %s65, 1
    %p69 = scmp.eq.s32.totalorder %s17, 1
    %p70 = scmp.ne.s32.totalorder %s65, %s67
    %p71 = scmp.eq.s32.totalorder %s17, 0
    %p72 = por %p70, %p71
    %p73 = scmp.ne.s32.totalorder %s65, %s67
    %p74 = scmp.eq.s32.totalorder %s22, 1
    %p75 = por %p73, %p74
    %p76 = scmp.ne.s32.totalorder %s67, %s68
    %p77 = scmp.eq.s32.totalorder %s22, 0
    %p78 = por %p76, %p77
    %p79 = scmp.ne.s32.totalorder %s67, %s68
    %p80 = scmp.eq.s32.totalorder %s23, 1
    %p81 = por %p79, %p80
    %p83 = scmp.ne.s32.totalorder %s68, %s82
    %p84 = scmp.eq.s32.totalorder %s23, 0
    %p85 = por %p83, %p84
    %s86 = ssub.s32 %s24, %s36
    %p87 = scmp.eq.s32.totalorder %s86, 0
    %s89 = sadd.s32 %s88, 1
    %s90 = scalar_select %p87, %s88, %s89
    %p93 = pneg %p87
    %p94 = scmp.eq.s32.totalorder %s17, 1
    %p95 = por %p93, %p94
    %p96 = scmp.ne.s32.totalorder %s88, %s91
    %p97 = scmp.eq.s32.totalorder %s17, 0
    %p98 = por %p96, %p97
    %p99 = scmp.ne.s32.totalorder %s88, %s91
    %p100 = scmp.eq.s32.totalorder %s22, 1
    %p101 = por %p99, %p100
    %p102 = scmp.ne.s32.totalorder %s91, %s92
    %p103 = scmp.eq.s32.totalorder %s22, 0
    %p104 = por %p102, %p103
    %p105 = scmp.ne.s32.totalorder %s91, %s92
    %p106 = scmp.eq.s32.totalorder %s23, 1
    %p107 = por %p105, %p106
    %p109 = scmp.ne.s32.totalorder %s92, %s108
    %p110 = scmp.eq.s32.totalorder %s23, 0
    %p111 = por %p109, %p110
    %p112 = scmp.le.s32.totalorder 1, %s17
    %p113 = scmp.lt.s32.totalorder %s17, 3
    %p114 = pnand %p112, %p113
    %p115 = pneg %p114
    // Predicated region
    $region9: #{tpu_custom_call.1} parent=5 // pred_check
      _
    $region10: #{tpu_custom_call.1} parent=5 // pred_check_branch
      %117 = sbr.rel (%p114) target = $region12
    $region11: #{tpu_custom_call.1} parent=5 // pred_region
      %s118 = ssub.s32 %s17, 1
      // Predicated region
      $region13: #{tpu_custom_call.1} parent=11 // pred_check
        %p119 = pneg %p78
      $region14: #{tpu_custom_call.1} parent=11 // pred_check_branch
        %121 = sbr.rel (%p119) target = $region16
      $region15: #{tpu_custom_call.1} parent=11 // pred_region
        _
      $region16: #{tpu_custom_call.1} parent=11 // pred_fallthru
        _
    $region12: #{tpu_custom_call.1} parent=5 // pred_fallthru
      _
    %p122 = scmp.lt.s32.totalorder %s17, 2
    // Predicated region
    $region17: #{tpu_custom_call.1} parent=5 // pred_check
      %p123 = pneg %p122
    $region18: #{tpu_custom_call.1} parent=5 // pred_check_branch
      %125 = sbr.rel (%p123) target = $region20
    $region19: #{tpu_custom_call.1} parent=5 // pred_region
      // Predicated region
      $region21: #{tpu_custom_call.1} parent=19 // pred_check
        %p126 = pneg %p51
      $region22: #{tpu_custom_call.1} parent=19 // pred_check_branch
        %128 = sbr.rel (%p126) target = $region24
      $region23: #{tpu_custom_call.1} parent=19 // pred_region
        %s129 = sadd.s32 %s24, %s25
        %p130 = scmp.lt.s32.totalorder %s129, 1
        %s131 = scalar_select %p130, %s129, 1
        %s132 = smul.addr %s131, 8
        %s133 = scalar_lea.vmem %s1, %s132
        %s134 = sadd.s32 %s24, %s25
      $region24: #{tpu_custom_call.1} parent=19 // pred_fallthru
        _
    $region20: #{tpu_custom_call.1} parent=5 // pred_fallthru
      _
    %p135 = scmp.le.s32.totalorder 1, %s17
    %p136 = scmp.lt.s32.totalorder %s17, 3
    %p137 = pnand %p135, %p136
    %p138 = pneg %p137
    // Predicated region
    $region25: #{tpu_custom_call.1} parent=5 // pred_check
      _
    $region26: #{tpu_custom_call.1} parent=5 // pred_check_branch
      %140 = sbr.rel (%p137) target = $region28
    $region27: #{tpu_custom_call.1} parent=5 // pred_region
      %s141 = ssub.s32 %s17, 1
      %s142 = sadd.s32 %s26, %s27
      %p143 = scmp.lt.s32.totalorder %s142, 1
      %s144 = scalar_select %p143, %s142, 1
      %s145 = smul.addr %s144, 8
      %s146 = scalar_lea.vmem %s1, %s145
      %p147 = pneg %p57
      %p148 = pneg %p54
      %p149 = pneg %p78
      %p150 = pneg %p75
      %p151 = pneg %p104
      %p152 = pneg %p101
      %p153 = scmp.lt.s32.totalorder %s26, 1
      %s154 = scalar_select %p153, %s26, 1
      %s155 = smul.addr %s154, 64
      %s156 = smul.addr %s155, 8
      %s157 = scalar_lea.vmem %s3, %s156
      %s158 = sadd.s32 %s26, %s27
      %p159 = scmp.lt.s32.totalorder %s158, 1
      %s160 = scalar_select %p159, %s158, 1
      %s161 = smul.addr %s160, 8
      %s162 = scalar_lea.vmem %s1, %s161
      %s163 = sadd.s32 %s26, %s27
      %p164 = scmp.lt.s32.totalorder %s26, 1
      %s165 = scalar_select %p164, %s26, 1
      %s166 = smul.addr %s165, 64
      %s167 = smul.addr %s166, 8
      %s168 = scalar_lea.vmem %s3, %s167
      %p169 = scmp.eq.s32.totalorder %s27, 0
      // Predicated region
      $region29: #{tpu_custom_call.1} parent=27 // pred_check
        %p170 = pneg %p169
      $region30: #{tpu_custom_call.1} parent=27 // pred_check_branch
        %172 = sbr.rel (%p170) target = $region32
      $region31: #{tpu_custom_call.1} parent=27 // pred_region
        %vm173 = vcmask 31744
        %174 = vst.msk [vmem:[%s168] sm:$0xff] %vm173, 0.0
        %175 = vst.msk [vmem:[%s168 + $0x8] sm:$0xff] %vm173, 0.0
        %176 = vst.msk [vmem:[%s168 + $0x10] sm:$0xff] %vm173, 0.0
        %177 = vst.msk [vmem:[%s168 + $0x18] sm:$0xff] %vm173, 0.0
        %178 = vst.msk [vmem:[%s168 + $0x20] sm:$0xff] %vm173, 0.0
        %179 = vst.msk [vmem:[%s168 + $0x28] sm:$0xff] %vm173, 0.0
        %180 = vst.msk [vmem:[%s168 + $0x30] sm:$0xff] %vm173, 0.0
        %181 = vst.msk [vmem:[%s168 + $0x38] sm:$0xff] %vm173, 0.0
        %182 = vst.msk [vmem:[%s168 + $0x40] sm:$0xff] %vm173, 0.0
        %183 = vst.msk [vmem:[%s168 + $0x48] sm:$0xff] %vm173, 0.0
        %184 = vst.msk [vmem:[%s168 + $0x50] sm:$0xff] %vm173, 0.0
        %185 = vst.msk [vmem:[%s168 + $0x58] sm:$0xff] %vm173, 0.0
        %186 = vst.msk [vmem:[%s168 + $0x60] sm:$0xff] %vm173, 0.0
        %187 = vst.msk [vmem:[%s168 + $0x68] sm:$0xff] %vm173, 0.0
        %188 = vst.msk [vmem:[%s168 + $0x70] sm:$0xff] %vm173, 0.0
        %189 = vst.msk [vmem:[%s168 + $0x78] sm:$0xff] %vm173, 0.0
        %190 = vst.msk [vmem:[%s168 + $0x80] sm:$0xff] %vm173, 0.0
        %191 = vst.msk [vmem:[%s168 + $0x88] sm:$0xff] %vm173, 0.0
        %192 = vst.msk [vmem:[%s168 + $0x90] sm:$0xff] %vm173, 0.0
        %193 = vst.msk [vmem:[%s168 + $0x98] sm:$0xff] %vm173, 0.0
        %194 = vst.msk [vmem:[%s168 + $0xa0] sm:$0xff] %vm173, 0.0
        %195 = vst.msk [vmem:[%s168 + $0xa8] sm:$0xff] %vm173, 0.0
        %196 = vst.msk [vmem:[%s168 + $0xb0] sm:$0xff] %vm173, 0.0
        %197 = vst.msk [vmem:[%s168 + $0xb8] sm:$0xff] %vm173, 0.0
        %198 = vst.msk [vmem:[%s168 + $0xc0] sm:$0xff] %vm173, 0.0
        %199 = vst.msk [vmem:[%s168 + $0xc8] sm:$0xff] %vm173, 0.0
        %200 = vst.msk [vmem:[%s168 + $0xd0] sm:$0xff] %vm173, 0.0
        %201 = vst.msk [vmem:[%s168 + $0xd8] sm:$0xff] %vm173, 0.0
        %202 = vst.msk [vmem:[%s168 + $0xe0] sm:$0xff] %vm173, 0.0
        %203 = vst.msk [vmem:[%s168 + $0xe8] sm:$0xff] %vm173, 0.0
        %204 = vst.msk [vmem:[%s168 + $0xf0] sm:$0xff] %vm173, 0.0
        %205 = vst.msk [vmem:[%s168 + $0xf8] sm:$0xff] %vm173, 0.0
        %206 = vst.msk [vmem:[%s168 + $0x100] sm:$0xff] %vm173, 0.0
        %207 = vst.msk [vmem:[%s168 + $0x108] sm:$0xff] %vm173, 0.0
        %208 = vst.msk [vmem:[%s168 + $0x110] sm:$0xff] %vm173, 0.0
        %209 = vst.msk [vmem:[%s168 + $0x118] sm:$0xff] %vm173, 0.0
        %210 = vst.msk [vmem:[%s168 + $0x120] sm:$0xff] %vm173, 0.0
        %211 = vst.msk [vmem:[%s168 + $0x128] sm:$0xff] %vm173, 0.0
        %212 = vst.msk [vmem:[%s168 + $0x130] sm:$0xff] %vm173, 0.0
        %213 = vst.msk [vmem:[%s168 + $0x138] sm:$0xff] %vm173, 0.0
        %214 = vst.msk [vmem:[%s168 + $0x140] sm:$0xff] %vm173, 0.0
        %215 = vst.msk [vmem:[%s168 + $0x148] sm:$0xff] %vm173, 0.0
        %216 = vst.msk [vmem:[%s168 + $0x150] sm:$0xff] %vm173, 0.0
        %217 = vst.msk [vmem:[%s168 + $0x158] sm:$0xff] %vm173, 0.0
        %218 = vst.msk [vmem:[%s168 + $0x160] sm:$0xff] %vm173, 0.0
        %219 = vst.msk [vmem:[%s168 + $0x168] sm:$0xff] %vm173, 0.0
        %220 = vst.msk [vmem:[%s168 + $0x170] sm:$0xff] %vm173, 0.0
        %221 = vst.msk [vmem:[%s168 + $0x178] sm:$0xff] %vm173, 0.0
        %222 = vst.msk [vmem:[%s168 + $0x180] sm:$0xff] %vm173, 0.0
        %223 = vst.msk [vmem:[%s168 + $0x188] sm:$0xff] %vm173, 0.0
        %224 = vst.msk [vmem:[%s168 + $0x190] sm:$0xff] %vm173, 0.0
        %225 = vst.msk [vmem:[%s168 + $0x198] sm:$0xff] %vm173, 0.0
        %226 = vst.msk [vmem:[%s168 + $0x1a0] sm:$0xff] %vm173, 0.0
        %227 = vst.msk [vmem:[%s168 + $0x1a8] sm:$0xff] %vm173, 0.0
        %228 = vst.msk [vmem:[%s168 + $0x1b0] sm:$0xff] %vm173, 0.0
        %229 = vst.msk [vmem:[%s168 + $0x1b8] sm:$0xff] %vm173, 0.0
        %230 = vst.msk [vmem:[%s168 + $0x1c0] sm:$0xff] %vm173, 0.0
        %231 = vst.msk [vmem:[%s168 + $0x1c8] sm:$0xff] %vm173, 0.0
        %232 = vst.msk [vmem:[%s168 + $0x1d0] sm:$0xff] %vm173, 0.0
        %233 = vst.msk [vmem:[%s168 + $0x1d8] sm:$0xff] %vm173, 0.0
        %234 = vst.msk [vmem:[%s168 + $0x1e0] sm:$0xff] %vm173, 0.0
        %235 = vst.msk [vmem:[%s168 + $0x1e8] sm:$0xff] %vm173, 0.0
        %236 = vst.msk [vmem:[%s168 + $0x1f0] sm:$0xff] %vm173, 0.0
        %237 = vst.msk [vmem:[%s168 + $0x1f8] sm:$0xff] %vm173, 0.0
      $region32: #{tpu_custom_call.1} parent=27 // pred_fallthru
        _
      %s238 = sadd.s32 %s26, %s27
      %s239 = smul.u32 %s238, 128
      %v240 = vld [vmem:[%s162] sm:$0xff]
      %v241 = vld [vmem:[%s2] sm:$0xff]
      %v242 = vld [vmem:[%s2 + $0x8] sm:$0xff]
      %v243 = vld [vmem:[%s2 + $0x10] sm:$0xff]
      %v244 = vld [vmem:[%s2 + $0x18] sm:$0xff]
      %v245 = vld [vmem:[%s2 + $0x20] sm:$0xff]
      %v246 = vld [vmem:[%s2 + $0x28] sm:$0xff]
      %v247 = vld [vmem:[%s2 + $0x30] sm:$0xff]
      %v248 = vld [vmem:[%s2 + $0x38] sm:$0xff]
      %v249 = vld [vmem:[%s2 + $0x40] sm:$0xff]
      %v250 = vld [vmem:[%s2 + $0x48] sm:$0xff]
      %v251 = vld [vmem:[%s2 + $0x50] sm:$0xff]
      %v252 = vld [vmem:[%s2 + $0x58] sm:$0xff]
      %v253 = vld [vmem:[%s2 + $0x60] sm:$0xff]
      %v254 = vld [vmem:[%s2 + $0x68] sm:$0xff]
      %v255 = vld [vmem:[%s2 + $0x70] sm:$0xff]
      %v256 = vld [vmem:[%s2 + $0x78] sm:$0xff]
      %v257 = vld [vmem:[%s2 + $0x80] sm:$0xff]
      %v258 = vld [vmem:[%s2 + $0x88] sm:$0xff]
      %v259 = vld [vmem:[%s2 + $0x90] sm:$0xff]
      %v260 = vld [vmem:[%s2 + $0x98] sm:$0xff]
      %v261 = vld [vmem:[%s2 + $0xa0] sm:$0xff]
      %v262 = vld [vmem:[%s2 + $0xa8] sm:$0xff]
      %v263 = vld [vmem:[%s2 + $0xb0] sm:$0xff]
      %v264 = vld [vmem:[%s2 + $0xb8] sm:$0xff]
      %v265 = vld [vmem:[%s2 + $0xc0] sm:$0xff]
      %v266 = vld [vmem:[%s2 + $0xc8] sm:$0xff]
      %v267 = vld [vmem:[%s2 + $0xd0] sm:$0xff]
      %v268 = vld [vmem:[%s2 + $0xd8] sm:$0xff]
      %v269 = vld [vmem:[%s2 + $0xe0] sm:$0xff]
      %v270 = vld [vmem:[%s2 + $0xe8] sm:$0xff]
      %v271 = vld [vmem:[%s2 + $0xf0] sm:$0xff]
      %v272 = vld [vmem:[%s2 + $0xf8] sm:$0xff]
      %v273 = vld [vmem:[%s2 + $0x100] sm:$0xff]
      %v274 = vld [vmem:[%s2 + $0x108] sm:$0xff]
      %v275 = vld [vmem:[%s2 + $0x110] sm:$0xff]
      %v276 = vld [vmem:[%s2 + $0x118] sm:$0xff]
      %v277 = vld [vmem:[%s2 + $0x120] sm:$0xff]
      %v278 = vld [vmem:[%s2 + $0x128] sm:$0xff]
      %v279 = vld [vmem:[%s2 + $0x130] sm:$0xff]
      %v280 = vld [vmem:[%s2 + $0x138] sm:$0xff]
      %v281 = vld [vmem:[%s2 + $0x140] sm:$0xff]
      %v282 = vld [vmem:[%s2 + $0x148] sm:$0xff]
      %v283 = vld [vmem:[%s2 + $0x150] sm:$0xff]
      %v284 = vld [vmem:[%s2 + $0x158] sm:$0xff]
      %v285 = vld [vmem:[%s2 + $0x160] sm:$0xff]
      %v286 = vld [vmem:[%s2 + $0x168] sm:$0xff]
      %v287 = vld [vmem:[%s2 + $0x170] sm:$0xff]
      %v288 = vld [vmem:[%s2 + $0x178] sm:$0xff]
      %v289 = vld [vmem:[%s2 + $0x180] sm:$0xff]
      %v290 = vld [vmem:[%s2 + $0x188] sm:$0xff]
      %v291 = vld [vmem:[%s2 + $0x190] sm:$0xff]
      %v292 = vld [vmem:[%s2 + $0x198] sm:$0xff]
      %v293 = vld [vmem:[%s2 + $0x1a0] sm:$0xff]
      %v294 = vld [vmem:[%s2 + $0x1a8] sm:$0xff]
      %v295 = vld [vmem:[%s2 + $0x1b0] sm:$0xff]
      %v296 = vld [vmem:[%s2 + $0x1b8] sm:$0xff]
      %v297 = vld [vmem:[%s2 + $0x1c0] sm:$0xff]
      %v298 = vld [vmem:[%s2 + $0x1c8] sm:$0xff]
      %v299 = vld [vmem:[%s2 + $0x1d0] sm:$0xff]
      %v300 = vld [vmem:[%s2 + $0x1d8] sm:$0xff]
      %v301 = vld [vmem:[%s2 + $0x1e0] sm:$0xff]
      %v302 = vld [vmem:[%s2 + $0x1e8] sm:$0xff]
      %v303 = vld [vmem:[%s2 + $0x1f0] sm:$0xff]
      %v304 = vld [vmem:[%s2 + $0x1f8] sm:$0xff]
      %vm305 = vcmask 64512
      %v307 = vsel %vm305, %v241, 0
      %v310 = vsel %vm305, %v242, 0
      %v313 = vsel %vm305, %v243, 0
      %v316 = vsel %vm305, %v244, 0
      %v319 = vsel %vm305, %v245, 0
      %v322 = vsel %vm305, %v246, 0
      %v325 = vsel %vm305, %v247, 0
      %v328 = vsel %vm305, %v248, 0
      %v331 = vsel %vm305, %v249, 0
      %v334 = vsel %vm305, %v250, 0
      %v337 = vsel %vm305, %v251, 0
      %v340 = vsel %vm305, %v252, 0
      %v343 = vsel %vm305, %v253, 0
      %v346 = vsel %vm305, %v254, 0
      %v349 = vsel %vm305, %v255, 0
      %v352 = vsel %vm305, %v256, 0
      %v355 = vsel %vm305, %v257, 0
      %v358 = vsel %vm305, %v258, 0
      %v361 = vsel %vm305, %v259, 0
      %v364 = vsel %vm305, %v260, 0
      %v367 = vsel %vm305, %v261, 0
      %v370 = vsel %vm305, %v262, 0
      %v373 = vsel %vm305, %v263, 0
      %v376 = vsel %vm305, %v264, 0
      %v379 = vsel %vm305, %v265, 0
      %v382 = vsel %vm305, %v266, 0
      %v385 = vsel %vm305, %v267, 0
      %v388 = vsel %vm305, %v268, 0
      %v391 = vsel %vm305, %v269, 0
      %v394 = vsel %vm305, %v270, 0
      %v397 = vsel %vm305, %v271, 0
      %v400 = vsel %vm305, %v272, 0
      %v403 = vsel %vm305, %v273, 0
      %v406 = vsel %vm305, %v274, 0
      %v409 = vsel %vm305, %v275, 0
      %v412 = vsel %vm305, %v276, 0
      %v415 = vsel %vm305, %v277, 0
      %v418 = vsel %vm305, %v278, 0
      %v421 = vsel %vm305, %v279, 0
      %v424 = vsel %vm305, %v280, 0
      %v427 = vsel %vm305, %v281, 0
      %v430 = vsel %vm305, %v282, 0
      %v433 = vsel %vm305, %v283, 0
      %v436 = vsel %vm305, %v284, 0
      %v439 = vsel %vm305, %v285, 0
      %v442 = vsel %vm305, %v286, 0
      %v445 = vsel %vm305, %v287, 0
      %v448 = vsel %vm305, %v288, 0
      %v451 = vsel %vm305, %v289, 0
      %v454 = vsel %vm305, %v290, 0
      %v457 = vsel %vm305, %v291, 0
      %v460 = vsel %vm305, %v292, 0
      %v463 = vsel %vm305, %v293, 0
      %v466 = vsel %vm305, %v294, 0
      %v469 = vsel %vm305, %v295, 0
      %v472 = vsel %vm305, %v296, 0
      %v475 = vsel %vm305, %v297, 0
      %v478 = vsel %vm305, %v298, 0
      %v481 = vsel %vm305, %v299, 0
      %v484 = vsel %vm305, %v300, 0
      %v487 = vsel %vm305, %v301, 0
      %v490 = vsel %vm305, %v302, 0
      %v493 = vsel %vm305, %v303, 0
      %v496 = vsel %vm305, %v304, 0
      %498 = vmatpush.msra.mxu0 0.0
      %499 = vmatpush.msra.mxu0 0.0
      %500 = vmatpush.msra.mxu0 0.0
      %501 = vmatpush.msra.mxu0 0.0
      %502 = vmatpush.msra.mxu0 0.0
      %503 = vmatpush.msra.mxu0 0.0
      %504 = vmatpush.msra.mxu0 0.0
      %505 = vmatpush.msra.mxu0 0.0
      %506 = vmatpush.msra.mxu0 0.0
      %507 = vmatpush.msra.mxu0 0.0
      %508 = vmatpush.msra.mxu0 0.0
      %509 = vmatpush.msra.mxu0 0.0
      %510 = vmatpush.msra.mxu0 0.0
      %511 = vmatpush.msra.mxu0 0.0
      %512 = vmatpush.msra.mxu0 0.0
      %513 = vmatpush.msra.mxu0 %v240
      %514 = vmatmul.f32.gmra.mxu0 %v307
      %v515 = vpop.f32.mrf.mxu0
      %v516 = vadd.f32 0.0, %v515
      %517 = vmatmul.f32.gmra.mxu0 %v310
      %v518 = vpop.f32.mrf.mxu0
      %v519 = vadd.f32 0.0, %v518
      %520 = vmatmul.f32.gmra.mxu0 %v313
      %v521 = vpop.f32.mrf.mxu0
      %v522 = vadd.f32 0.0, %v521
      %523 = vmatmul.f32.gmra.mxu0 %v316
      %v524 = vpop.f32.mrf.mxu0
      %v525 = vadd.f32 0.0, %v524
      %526 = vmatmul.f32.gmra.mxu0 %v319
      %v527 = vpop.f32.mrf.mxu0
      %v528 = vadd.f32 0.0, %v527
      %529 = vmatmul.f32.gmra.mxu0 %v322
      %v530 = vpop.f32.mrf.mxu0
      %v531 = vadd.f32 0.0, %v530
      %532 = vmatmul.f32.gmra.mxu0 %v325
      %v533 = vpop.f32.mrf.mxu0
      %v534 = vadd.f32 0.0, %v533
      %535 = vmatmul.f32.gmra.mxu0 %v328
      %v536 = vpop.f32.mrf.mxu0
      %v537 = vadd.f32 0.0, %v536
      %538 = vmatmul.f32.gmra.mxu0 %v331
      %v539 = vpop.f32.mrf.mxu0
      %v540 = vadd.f32 0.0, %v539
      %541 = vmatmul.f32.gmra.mxu0 %v334
      %v542 = vpop.f32.mrf.mxu0
      %v543 = vadd.f32 0.0, %v542
      %544 = vmatmul.f32.gmra.mxu0 %v337
      %v545 = vpop.f32.mrf.mxu0
      %v546 = vadd.f32 0.0, %v545
      %547 = vmatmul.f32.gmra.mxu0 %v340
      %v548 = vpop.f32.mrf.mxu0
      %v549 = vadd.f32 0.0, %v548
      %550 = vmatmul.f32.gmra.mxu0 %v343
      %v551 = vpop.f32.mrf.mxu0
      %v552 = vadd.f32 0.0, %v551
      %553 = vmatmul.f32.gmra.mxu0 %v346
      %v554 = vpop.f32.mrf.mxu0
      %v555 = vadd.f32 0.0, %v554
      %556 = vmatmul.f32.gmra.mxu0 %v349
      %v557 = vpop.f32.mrf.mxu0
      %v558 = vadd.f32 0.0, %v557
      %559 = vmatmul.f32.gmra.mxu0 %v352
      %v560 = vpop.f32.mrf.mxu0
      %v561 = vadd.f32 0.0, %v560
      %562 = vmatmul.f32.gmra.mxu0 %v355
      %v563 = vpop.f32.mrf.mxu0
      %v564 = vadd.f32 0.0, %v563
      %565 = vmatmul.f32.gmra.mxu0 %v358
      %v566 = vpop.f32.mrf.mxu0
      %v567 = vadd.f32 0.0, %v566
      %568 = vmatmul.f32.gmra.mxu0 %v361
      %v569 = vpop.f32.mrf.mxu0
      %v570 = vadd.f32 0.0, %v569
      %571 = vmatmul.f32.gmra.mxu0 %v364
      %v572 = vpop.f32.mrf.mxu0
      %v573 = vadd.f32 0.0, %v572
      %574 = vmatmul.f32.gmra.mxu0 %v367
      %v575 = vpop.f32.mrf.mxu0
      %v576 = vadd.f32 0.0, %v575
      %577 = vmatmul.f32.gmra.mxu0 %v370
      %v578 = vpop.f32.mrf.mxu0
      %v579 = vadd.f32 0.0, %v578
      %580 = vmatmul.f32.gmra.mxu0 %v373
      %v581 = vpop.f32.mrf.mxu0
      %v582 = vadd.f32 0.0, %v581
      %583 = vmatmul.f32.gmra.mxu0 %v376
      %v584 = vpop.f32.mrf.mxu0
      %v585 = vadd.f32 0.0, %v584
      %586 = vmatmul.f32.gmra.mxu0 %v379
      %v587 = vpop.f32.mrf.mxu0
      %v588 = vadd.f32 0.0, %v587
      %589 = vmatmul.f32.gmra.mxu0 %v382
      %v590 = vpop.f32.mrf.mxu0
      %v591 = vadd.f32 0.0, %v590
      %592 = vmatmul.f32.gmra.mxu0 %v385
      %v593 = vpop.f32.mrf.mxu0
      %v594 = vadd.f32 0.0, %v593
      %595 = vmatmul.f32.gmra.mxu0 %v388
      %v596 = vpop.f32.mrf.mxu0
      %v597 = vadd.f32 0.0, %v596
      %598 = vmatmul.f32.gmra.mxu0 %v391
      %v599 = vpop.f32.mrf.mxu0
      %v600 = vadd.f32 0.0, %v599
      %601 = vmatmul.f32.gmra.mxu0 %v394
      %v602 = vpop.f32.mrf.mxu0
      %v603 = vadd.f32 0.0, %v602
      %604 = vmatmul.f32.gmra.mxu0 %v397
      %v605 = vpop.f32.mrf.mxu0
      %v606 = vadd.f32 0.0, %v605
      %607 = vmatmul.f32.gmra.mxu0 %v400
      %v608 = vpop.f32.mrf.mxu0
      %v609 = vadd.f32 0.0, %v608
      %610 = vmatmul.f32.gmra.mxu0 %v403
      %v611 = vpop.f32.mrf.mxu0
      %v612 = vadd.f32 0.0, %v611
      %613 = vmatmul.f32.gmra.mxu0 %v406
      %v614 = vpop.f32.mrf.mxu0
      %v615 = vadd.f32 0.0, %v614
      %616 = vmatmul.f32.gmra.mxu0 %v409
      %v617 = vpop.f32.mrf.mxu0
      %v618 = vadd.f32 0.0, %v617
      %619 = vmatmul.f32.gmra.mxu0 %v412
      %v620 = vpop.f32.mrf.mxu0
      %v621 = vadd.f32 0.0, %v620
      %622 = vmatmul.f32.gmra.mxu0 %v415
      %v623 = vpop.f32.mrf.mxu0
      %v624 = vadd.f32 0.0, %v623
      %625 = vmatmul.f32.gmra.mxu0 %v418
      %v626 = vpop.f32.mrf.mxu0
      %v627 = vadd.f32 0.0, %v626
      %628 = vmatmul.f32.gmra.mxu0 %v421
      %v629 = vpop.f32.mrf.mxu0
      %v630 = vadd.f32 0.0, %v629
      %631 = vmatmul.f32.gmra.mxu0 %v424
      %v632 = vpop.f32.mrf.mxu0
      %v633 = vadd.f32 0.0, %v632
      %634 = vmatmul.f32.gmra.mxu0 %v427
      %v635 = vpop.f32.mrf.mxu0
      %v636 = vadd.f32 0.0, %v635
      %637 = vmatmul.f32.gmra.mxu0 %v430
      %v638 = vpop.f32.mrf.mxu0
      %v639 = vadd.f32 0.0, %v638
      %640 = vmatmul.f32.gmra.mxu0 %v433
      %v641 = vpop.f32.mrf.mxu0
      %v642 = vadd.f32 0.0, %v641
      %643 = vmatmul.f32.gmra.mxu0 %v436
      %v644 = vpop.f32.mrf.mxu0
      %v645 = vadd.f32 0.0, %v644
      %646 = vmatmul.f32.gmra.mxu0 %v439
      %v647 = vpop.f32.mrf.mxu0
      %v648 = vadd.f32 0.0, %v647
      %649 = vmatmul.f32.gmra.mxu0 %v442
      %v650 = vpop.f32.mrf.mxu0
      %v651 = vadd.f32 0.0, %v650
      %652 = vmatmul.f32.gmra.mxu0 %v445
      %v653 = vpop.f32.mrf.mxu0
      %v654 = vadd.f32 0.0, %v653
      %655 = vmatmul.f32.gmra.mxu0 %v448
      %v656 = vpop.f32.mrf.mxu0
      %v657 = vadd.f32 0.0, %v656
      %658 = vmatmul.f32.gmra.mxu0 %v451
      %v659 = vpop.f32.mrf.mxu0
      %v660 = vadd.f32 0.0, %v659
      %661 = vmatmul.f32.gmra.mxu0 %v454
      %v662 = vpop.f32.mrf.mxu0
      %v663 = vadd.f32 0.0, %v662
      %664 = vmatmul.f32.gmra.mxu0 %v457
      %v665 = vpop.f32.mrf.mxu0
      %v666 = vadd.f32 0.0, %v665
      %667 = vmatmul.f32.gmra.mxu0 %v460
      %v668 = vpop.f32.mrf.mxu0
      %v669 = vadd.f32 0.0, %v668
      %670 = vmatmul.f32.gmra.mxu0 %v463
      %v671 = vpop.f32.mrf.mxu0
      %v672 = vadd.f32 0.0, %v671
      %673 = vmatmul.f32.gmra.mxu0 %v466
      %v674 = vpop.f32.mrf.mxu0
      %v675 = vadd.f32 0.0, %v674
      %676 = vmatmul.f32.gmra.mxu0 %v469
      %v677 = vpop.f32.mrf.mxu0
      %v678 = vadd.f32 0.0, %v677
      %679 = vmatmul.f32.gmra.mxu0 %v472
      %v680 = vpop.f32.mrf.mxu0
      %v681 = vadd.f32 0.0, %v680
      %682 = vmatmul.f32.gmra.mxu0 %v475
      %v683 = vpop.f32.mrf.mxu0
      %v684 = vadd.f32 0.0, %v683
      %685 = vmatmul.f32.gmra.mxu0 %v478
      %v686 = vpop.f32.mrf.mxu0
      %v687 = vadd.f32 0.0, %v686
      %688 = vmatmul.f32.gmra.mxu0 %v481
      %v689 = vpop.f32.mrf.mxu0
      %v690 = vadd.f32 0.0, %v689
      %691 = vmatmul.f32.gmra.mxu0 %v484
      %v692 = vpop.f32.mrf.mxu0
      %v693 = vadd.f32 0.0, %v692
      %694 = vmatmul.f32.gmra.mxu0 %v487
      %v695 = vpop.f32.mrf.mxu0
      %v696 = vadd.f32 0.0, %v695
      %697 = vmatmul.f32.gmra.mxu0 %v490
      %v698 = vpop.f32.mrf.mxu0
      %v699 = vadd.f32 0.0, %v698
      %700 = vmatmul.f32.gmra.mxu0 %v493
      %v701 = vpop.f32.mrf.mxu0
      %v702 = vadd.f32 0.0, %v701
      %703 = vmatmul.f32.gmra.mxu0 %v496
      %v704 = vpop.f32.mrf.mxu0
      %v705 = vadd.f32 0.0, %v704
      %706 = vdwg.mxu0
      %v707 = vmax.f32 %v516, 0.0
      %v708 = vmax.f32 %v519, 0.0
      %v709 = vmax.f32 %v522, 0.0
      %v710 = vmax.f32 %v525, 0.0
      %v711 = vmax.f32 %v528, 0.0
      %v712 = vmax.f32 %v531, 0.0
      %v713 = vmax.f32 %v534, 0.0
      %v714 = vmax.f32 %v537, 0.0
      %v715 = vmax.f32 %v540, 0.0
      %v716 = vmax.f32 %v543, 0.0
      %v717 = vmax.f32 %v546, 0.0
      %v718 = vmax.f32 %v549, 0.0
      %v719 = vmax.f32 %v552, 0.0
      %v720 = vmax.f32 %v555, 0.0
      %v721 = vmax.f32 %v558, 0.0
      %v722 = vmax.f32 %v561, 0.0
      %v723 = vmax.f32 %v564, 0.0
      %v724 = vmax.f32 %v567, 0.0
      %v725 = vmax.f32 %v570, 0.0
      %v726 = vmax.f32 %v573, 0.0
      %v727 = vmax.f32 %v576, 0.0
      %v728 = vmax.f32 %v579, 0.0
      %v729 = vmax.f32 %v582, 0.0
      %v730 = vmax.f32 %v585, 0.0
      %v731 = vmax.f32 %v588, 0.0
      %v732 = vmax.f32 %v591, 0.0
      %v733 = vmax.f32 %v594, 0.0
      %v734 = vmax.f32 %v597, 0.0
      %v735 = vmax.f32 %v600, 0.0
      %v736 = vmax.f32 %v603, 0.0
      %v737 = vmax.f32 %v606, 0.0
      %v738 = vmax.f32 %v609, 0.0
      %v739 = vmax.f32 %v612, 0.0
      %v740 = vmax.f32 %v615, 0.0
      %v741 = vmax.f32 %v618, 0.0
      %v742 = vmax.f32 %v621, 0.0
      %v743 = vmax.f32 %v624, 0.0
      %v744 = vmax.f32 %v627, 0.0
      %v745 = vmax.f32 %v630, 0.0
      %v746 = vmax.f32 %v633, 0.0
      %v747 = vmax.f32 %v636, 0.0
      %v748 = vmax.f32 %v639, 0.0
      %v749 = vmax.f32 %v642, 0.0
      %v750 = vmax.f32 %v645, 0.0
      %v751 = vmax.f32 %v648, 0.0
      %v752 = vmax.f32 %v651, 0.0
      %v753 = vmax.f32 %v654, 0.0
      %v754 = vmax.f32 %v657, 0.0
      %v755 = vmax.f32 %v660, 0.0
      %v756 = vmax.f32 %v663, 0.0
      %v757 = vmax.f32 %v666, 0.0
      %v758 = vmax.f32 %v669, 0.0
      %v759 = vmax.f32 %v672, 0.0
      %v760 = vmax.f32 %v675, 0.0
      %v761 = vmax.f32 %v678, 0.0
      %v762 = vmax.f32 %v681, 0.0
      %v763 = vmax.f32 %v684, 0.0
      %v764 = vmax.f32 %v687, 0.0
      %v765 = vmax.f32 %v690, 0.0
      %v766 = vmax.f32 %v693, 0.0
      %v767 = vmax.f32 %v696, 0.0
      %v768 = vmax.f32 %v699, 0.0
      %v769 = vmax.f32 %v702, 0.0
      %v770 = vmax.f32 %v705, 0.0
      %v771 = vlaneseq
      %v772 = vshrl.u32 %v771, 7
      %v773 = vadd.s32 %v772, 8
      %v774 = vadd.s32 %v772, 16
      %v775 = vadd.s32 %v772, 24
      %v776 = vadd.s32 %v772, 32
      %v777 = vadd.s32 %v772, 40
      %v778 = vadd.s32 %v772, 48
      %v779 = vadd.s32 %v772, 56
      %v780 = vadd.s32 %v772, 64
      %v781 = vadd.s32 %v772, 72
      %v782 = vadd.s32 %v772, 80
      %v783 = vadd.s32 %v772, 88
      %v784 = vadd.s32 %v772, 96
      %v785 = vadd.s32 %v772, 104
      %v786 = vadd.s32 %v772, 112
      %v787 = vadd.s32 %v772, 120
      %v788 = vstv %s239
      %v789 = vadd.s32 %v772, %v788
      %v790 = vadd.s32 %v773, %v788
      %v791 = vadd.s32 %v774, %v788
      %v792 = vadd.s32 %v775, %v788
      %v793 = vadd.s32 %v776, %v788
      %v794 = vadd.s32 %v777, %v788
      %v795 = vadd.s32 %v778, %v788
      %v796 = vadd.s32 %v779, %v788
      %v797 = vadd.s32 %v780, %v788
      %v798 = vadd.s32 %v781, %v788
      %v799 = vadd.s32 %v782, %v788
      %v800 = vadd.s32 %v783, %v788
      %v801 = vadd.s32 %v784, %v788
      %v802 = vadd.s32 %v785, %v788
      %v803 = vadd.s32 %v786, %v788
      %v804 = vadd.s32 %v787, %v788
      %s805 = sld [smem:[#allocation3]]
      %v806 = vstv %s805
      %vm807 = vcmp.ge.s32.totalorder %v789, %v806
      %vm808 = vcmp.ge.s32.totalorder %v790, %v806
      %vm809 = vcmp.ge.s32.totalorder %v791, %v806
      %vm810 = vcmp.ge.s32.totalorder %v792, %v806
      %vm811 = vcmp.ge.s32.totalorder %v793, %v806
      %vm812 = vcmp.ge.s32.totalorder %v794, %v806
      %vm813 = vcmp.ge.s32.totalorder %v795, %v806
      %vm814 = vcmp.ge.s32.totalorder %v796, %v806
      %vm815 = vcmp.ge.s32.totalorder %v797, %v806
      %vm816 = vcmp.ge.s32.totalorder %v798, %v806
      %vm817 = vcmp.ge.s32.totalorder %v799, %v806
      %vm818 = vcmp.ge.s32.totalorder %v800, %v806
      %vm819 = vcmp.ge.s32.totalorder %v801, %v806
      %vm820 = vcmp.ge.s32.totalorder %v802, %v806
      %vm821 = vcmp.ge.s32.totalorder %v803, %v806
      %vm822 = vcmp.ge.s32.totalorder %v804, %v806
      %v823 = vsel %vm807, 1, 0
      %v824 = vsel %vm808, 1, 0
      %v825 = vsel %vm809, 1, 0
      %v826 = vsel %vm810, 1, 0
      %v827 = vsel %vm811, 1, 0
      %v828 = vsel %vm812, 1, 0
      %v829 = vsel %vm813, 1, 0
      %v830 = vsel %vm814, 1, 0
      %v831 = vsel %vm815, 1, 0
      %v832 = vsel %vm816, 1, 0
      %v833 = vsel %vm817, 1, 0
      %v834 = vsel %vm818, 1, 0
      %v835 = vsel %vm819, 1, 0
      %v836 = vsel %vm820, 1, 0
      %v837 = vsel %vm821, 1, 0
      %v838 = vsel %vm822, 1, 0
      %s839 = sld [smem:[#allocation3 + $0x1]]
      %v840 = vstv %s839
      %vm841 = vcmp.ge.s32.totalorder %v789, %v840
      %vm842 = vcmp.ge.s32.totalorder %v790, %v840
      %vm843 = vcmp.ge.s32.totalorder %v791, %v840
      %vm844 = vcmp.ge.s32.totalorder %v792, %v840
      %vm845 = vcmp.ge.s32.totalorder %v793, %v840
      %vm846 = vcmp.ge.s32.totalorder %v794, %v840
      %vm847 = vcmp.ge.s32.totalorder %v795, %v840
      %vm848 = vcmp.ge.s32.totalorder %v796, %v840
      %vm849 = vcmp.ge.s32.totalorder %v797, %v840
      %vm850 = vcmp.ge.s32.totalorder %v798, %v840
      %vm851 = vcmp.ge.s32.totalorder %v799, %v840
      %vm852 = vcmp.ge.s32.totalorder %v800, %v840
      %vm853 = vcmp.ge.s32.totalorder %v801, %v840
      %vm854 = vcmp.ge.s32.totalorder %v802, %v840
      %vm855 = vcmp.ge.s32.totalorder %v803, %v840
      %vm856 = vcmp.ge.s32.totalorder %v804, %v840
      %v857 = vsel %vm841, 1, 0
      %v858 = vsel %vm842, 1, 0
      %v859 = vsel %vm843, 1, 0
      %v860 = vsel %vm844, 1, 0
      %v861 = vsel %vm845, 1, 0
      %v862 = vsel %vm846, 1, 0
      %v863 = vsel %vm847, 1, 0
      %v864 = vsel %vm848, 1, 0
      %v865 = vsel %vm849, 1, 0
      %v866 = vsel %vm850, 1, 0
      %v867 = vsel %vm851, 1, 0
      %v868 = vsel %vm852, 1, 0
      %v869 = vsel %vm853, 1, 0
      %v870 = vsel %vm854, 1, 0
      %v871 = vsel %vm855, 1, 0
      %v872 = vsel %vm856, 1, 0
      %v873 = vadd.s32 %v823, %v857
      %v874 = vadd.s32 %v824, %v858
      %v875 = vadd.s32 %v825, %v859
      %v876 = vadd.s32 %v826, %v860
      %v877 = vadd.s32 %v827, %v861
      %v878 = vadd.s32 %v828, %v862
      %v879 = vadd.s32 %v829, %v863
      %v880 = vadd.s32 %v830, %v864
      %v881 = vadd.s32 %v831, %v865
      %v882 = vadd.s32 %v832, %v866
      %v883 = vadd.s32 %v833, %v867
      %v884 = vadd.s32 %v834, %v868
      %v885 = vadd.s32 %v835, %v869
      %v886 = vadd.s32 %v836, %v870
      %v887 = vadd.s32 %v837, %v871
      %v888 = vadd.s32 %v838, %v872
      %s889 = sld [smem:[#allocation3 + $0x2]]
      %v890 = vstv %s889
      %vm891 = vcmp.ge.s32.totalorder %v789, %v890
      %vm892 = vcmp.ge.s32.totalorder %v790, %v890
      %vm893 = vcmp.ge.s32.totalorder %v791, %v890
      %vm894 = vcmp.ge.s32.totalorder %v792, %v890
      %vm895 = vcmp.ge.s32.totalorder %v793, %v890
      %vm896 = vcmp.ge.s32.totalorder %v794, %v890
      %vm897 = vcmp.ge.s32.totalorder %v795, %v890
      %vm898 = vcmp.ge.s32.totalorder %v796, %v890
      %vm899 = vcmp.ge.s32.totalorder %v797, %v890
      %vm900 = vcmp.ge.s32.totalorder %v798, %v890
      %vm901 = vcmp.ge.s32.totalorder %v799, %v890
      %vm902 = vcmp.ge.s32.totalorder %v800, %v890
      %vm903 = vcmp.ge.s32.totalorder %v801, %v890
      %vm904 = vcmp.ge.s32.totalorder %v802, %v890
      %vm905 = vcmp.ge.s32.totalorder %v803, %v890
      %vm906 = vcmp.ge.s32.totalorder %v804, %v890
      %v907 = vsel %vm891, 1, 0
      %v908 = vsel %vm892, 1, 0
      %v909 = vsel %vm893, 1, 0
      %v910 = vsel %vm894, 1, 0
      %v911 = vsel %vm895, 1, 0
      %v912 = vsel %vm896, 1, 0
      %v913 = vsel %vm897, 1, 0
      %v914 = vsel %vm898, 1, 0
      %v915 = vsel %vm899, 1, 0
      %v916 = vsel %vm900, 1, 0
      %v917 = vsel %vm901, 1, 0
      %v918 = vsel %vm902, 1, 0
      %v919 = vsel %vm903, 1, 0
      %v920 = vsel %vm904, 1, 0
      %v921 = vsel %vm905, 1, 0
      %v922 = vsel %vm906, 1, 0
      %v923 = vadd.s32 %v873, %v907
      %v924 = vadd.s32 %v874, %v908
      %v925 = vadd.s32 %v875, %v909
      %v926 = vadd.s32 %v876, %v910
      %v927 = vadd.s32 %v877, %v911
      %v928 = vadd.s32 %v878, %v912
      %v929 = vadd.s32 %v879, %v913
      %v930 = vadd.s32 %v880, %v914
      %v931 = vadd.s32 %v881, %v915
      %v932 = vadd.s32 %v882, %v916
      %v933 = vadd.s32 %v883, %v917
      %v934 = vadd.s32 %v884, %v918
      %v935 = vadd.s32 %v885, %v919
      %v936 = vadd.s32 %v886, %v920
      %v937 = vadd.s32 %v887, %v921
      %v938 = vadd.s32 %v888, %v922
      %s939 = sld [smem:[#allocation3 + $0x3]]
      %v940 = vstv %s939
      %vm941 = vcmp.ge.s32.totalorder %v789, %v940
      %vm942 = vcmp.ge.s32.totalorder %v790, %v940
      %vm943 = vcmp.ge.s32.totalorder %v791, %v940
      %vm944 = vcmp.ge.s32.totalorder %v792, %v940
      %vm945 = vcmp.ge.s32.totalorder %v793, %v940
      %vm946 = vcmp.ge.s32.totalorder %v794, %v940
      %vm947 = vcmp.ge.s32.totalorder %v795, %v940
      %vm948 = vcmp.ge.s32.totalorder %v796, %v940
      %vm949 = vcmp.ge.s32.totalorder %v797, %v940
      %vm950 = vcmp.ge.s32.totalorder %v798, %v940
      %vm951 = vcmp.ge.s32.totalorder %v799, %v940
      %vm952 = vcmp.ge.s32.totalorder %v800, %v940
      %vm953 = vcmp.ge.s32.totalorder %v801, %v940
      %vm954 = vcmp.ge.s32.totalorder %v802, %v940
      %vm955 = vcmp.ge.s32.totalorder %v803, %v940
      %vm956 = vcmp.ge.s32.totalorder %v804, %v940
      %v957 = vsel %vm941, 1, 0
      %v958 = vsel %vm942, 1, 0
      %v959 = vsel %vm943, 1, 0
      %v960 = vsel %vm944, 1, 0
      %v961 = vsel %vm945, 1, 0
      %v962 = vsel %vm946, 1, 0
      %v963 = vsel %vm947, 1, 0
      %v964 = vsel %vm948, 1, 0
      %v965 = vsel %vm949, 1, 0
      %v966 = vsel %vm950, 1, 0
      %v967 = vsel %vm951, 1, 0
      %v968 = vsel %vm952, 1, 0
      %v969 = vsel %vm953, 1, 0
      %v970 = vsel %vm954, 1, 0
      %v971 = vsel %vm955, 1, 0
      %v972 = vsel %vm956, 1, 0
      %v973 = vadd.s32 %v923, %v957
      %v974 = vadd.s32 %v924, %v958
      %v975 = vadd.s32 %v925, %v959
      %v976 = vadd.s32 %v926, %v960
      %v977 = vadd.s32 %v927, %v961
      %v978 = vadd.s32 %v928, %v962
      %v979 = vadd.s32 %v929, %v963
      %v980 = vadd.s32 %v930, %v964
      %v981 = vadd.s32 %v931, %v965
      %v982 = vadd.s32 %v932, %v966
      %v983 = vadd.s32 %v933, %v967
      %v984 = vadd.s32 %v934, %v968
      %v985 = vadd.s32 %v935, %v969
      %v986 = vadd.s32 %v936, %v970
      %v987 = vadd.s32 %v937, %v971
      %v988 = vadd.s32 %v938, %v972
      %v989 = vlaneseq
      %v990 = vand.u32 %v989, 127
      %vm991 = vcmp.eq.s32.totalorder %v990, %v973
      %vm992 = vcmp.eq.s32.totalorder %v990, %v974
      %vm993 = vcmp.eq.s32.totalorder %v990, %v975
      %vm994 = vcmp.eq.s32.totalorder %v990, %v976
      %vm995 = vcmp.eq.s32.totalorder %v990, %v977
      %vm996 = vcmp.eq.s32.totalorder %v990, %v978
      %vm997 = vcmp.eq.s32.totalorder %v990, %v979
      %vm998 = vcmp.eq.s32.totalorder %v990, %v980
      %vm999 = vcmp.eq.s32.totalorder %v990, %v981
      %vm1000 = vcmp.eq.s32.totalorder %v990, %v982
      %vm1001 = vcmp.eq.s32.totalorder %v990, %v983
      %vm1002 = vcmp.eq.s32.totalorder %v990, %v984
      %vm1003 = vcmp.eq.s32.totalorder %v990, %v985
      %vm1004 = vcmp.eq.s32.totalorder %v990, %v986
      %vm1005 = vcmp.eq.s32.totalorder %v990, %v987
      %vm1006 = vcmp.eq.s32.totalorder %v990, %v988
      %v1007 = vsel %vm991, 1, 0
      %v1008 = vsel %vm992, 1, 0
      %v1009 = vsel %vm993, 1, 0
      %v1010 = vsel %vm994, 1, 0
      %v1011 = vsel %vm995, 1, 0
      %v1012 = vsel %vm996, 1, 0
      %v1013 = vsel %vm997, 1, 0
      %v1014 = vsel %vm998, 1, 0
      %v1015 = vsel %vm999, 1, 0
      %v1016 = vsel %vm1000, 1, 0
      %v1017 = vsel %vm1001, 1, 0
      %v1018 = vsel %vm1002, 1, 0
      %v1019 = vsel %vm1003, 1, 0
      %v1020 = vsel %vm1004, 1, 0
      %v1021 = vsel %vm1005, 1, 0
      %v1022 = vsel %vm1006, 1, 0
      %v1023 = vcvt.s32.f32 %v1007
      %v1024 = vcvt.s32.f32 %v1008
      %v1025 = vcvt.s32.f32 %v1009
      %v1026 = vcvt.s32.f32 %v1010
      %v1027 = vcvt.s32.f32 %v1011
      %v1028 = vcvt.s32.f32 %v1012
      %v1029 = vcvt.s32.f32 %v1013
      %v1030 = vcvt.s32.f32 %v1014
      %v1031 = vcvt.s32.f32 %v1015
      %v1032 = vcvt.s32.f32 %v1016
      %v1033 = vcvt.s32.f32 %v1017
      %v1034 = vcvt.s32.f32 %v1018
      %v1035 = vcvt.s32.f32 %v1019
      %v1036 = vcvt.s32.f32 %v1020
      %v1037 = vcvt.s32.f32 %v1021
      %v1038 = vcvt.s32.f32 %v1022
      %v1039 = vpack.c.bf16 %v1024, %v1023
      %v1040 = vpack.c.bf16 %v1026, %v1025
      %v1041 = vpack.c.bf16 %v1028, %v1027
      %v1042 = vpack.c.bf16 %v1030, %v1029
      %v1043 = vpack.c.bf16 %v1032, %v1031
      %v1044 = vpack.c.bf16 %v1034, %v1033
      %v1045 = vpack.c.bf16 %v1036, %v1035
      %v1046 = vpack.c.bf16 %v1038, %v1037
      %v1047 = vld [vmem:[%s168] sm:$0xff]
      %v1048 = vld [vmem:[%s168 + $0x8] sm:$0xff]
      %v1049 = vld [vmem:[%s168 + $0x10] sm:$0xff]
      %v1050 = vld [vmem:[%s168 + $0x18] sm:$0xff]
      %v1051 = vld [vmem:[%s168 + $0x20] sm:$0xff]
      %v1052 = vld [vmem:[%s168 + $0x28] sm:$0xff]
      %v1053 = vld [vmem:[%s168 + $0x30] sm:$0xff]
      %v1054 = vld [vmem:[%s168 + $0x38] sm:$0xff]
      %v1055 = vld [vmem:[%s168 + $0x40] sm:$0xff]
      %v1056 = vld [vmem:[%s168 + $0x48] sm:$0xff]
      %v1057 = vld [vmem:[%s168 + $0x50] sm:$0xff]
      %v1058 = vld [vmem:[%s168 + $0x58] sm:$0xff]
      %v1059 = vld [vmem:[%s168 + $0x60] sm:$0xff]
      %v1060 = vld [vmem:[%s168 + $0x68] sm:$0xff]
      %v1061 = vld [vmem:[%s168 + $0x70] sm:$0xff]
      %v1062 = vld [vmem:[%s168 + $0x78] sm:$0xff]
      %v1063 = vld [vmem:[%s168 + $0x80] sm:$0xff]
      %v1064 = vld [vmem:[%s168 + $0x88] sm:$0xff]
      %v1065 = vld [vmem:[%s168 + $0x90] sm:$0xff]
      %v1066 = vld [vmem:[%s168 + $0x98] sm:$0xff]
      %v1067 = vld [vmem:[%s168 + $0xa0] sm:$0xff]
      %v1068 = vld [vmem:[%s168 + $0xa8] sm:$0xff]
      %v1069 = vld [vmem:[%s168 + $0xb0] sm:$0xff]
      %v1070 = vld [vmem:[%s168 + $0xb8] sm:$0xff]
      %v1071 = vld [vmem:[%s168 + $0xc0] sm:$0xff]
      %v1072 = vld [vmem:[%s168 + $0xc8] sm:$0xff]
      %v1073 = vld [vmem:[%s168 + $0xd0] sm:$0xff]
      %v1074 = vld [vmem:[%s168 + $0xd8] sm:$0xff]
      %v1075 = vld [vmem:[%s168 + $0xe0] sm:$0xff]
      %v1076 = vld [vmem:[%s168 + $0xe8] sm:$0xff]
      %v1077 = vld [vmem:[%s168 + $0xf0] sm:$0xff]
      %v1078 = vld [vmem:[%s168 + $0xf8] sm:$0xff]
      %v1079 = vld [vmem:[%s168 + $0x100] sm:$0xff]
      %v1080 = vld [vmem:[%s168 + $0x108] sm:$0xff]
      %v1081 = vld [vmem:[%s168 + $0x110] sm:$0xff]
      %v1082 = vld [vmem:[%s168 + $0x118] sm:$0xff]
      %v1083 = vld [vmem:[%s168 + $0x120] sm:$0xff]
      %v1084 = vld [vmem:[%s168 + $0x128] sm:$0xff]
      %v1085 = vld [vmem:[%s168 + $0x130] sm:$0xff]
      %v1086 = vld [vmem:[%s168 + $0x138] sm:$0xff]
      %v1087 = vld [vmem:[%s168 + $0x140] sm:$0xff]
      %v1088 = vld [vmem:[%s168 + $0x148] sm:$0xff]
      %v1089 = vld [vmem:[%s168 + $0x150] sm:$0xff]
      %v1090 = vld [vmem:[%s168 + $0x158] sm:$0xff]
      %v1091 = vld [vmem:[%s168 + $0x160] sm:$0xff]
      %v1092 = vld [vmem:[%s168 + $0x168] sm:$0xff]
      %v1093 = vld [vmem:[%s168 + $0x170] sm:$0xff]
      %v1094 = vld [vmem:[%s168 + $0x178] sm:$0xff]
      %v1095 = vld [vmem:[%s168 + $0x180] sm:$0xff]
      %v1096 = vld [vmem:[%s168 + $0x188] sm:$0xff]
      %v1097 = vld [vmem:[%s168 + $0x190] sm:$0xff]
      %v1098 = vld [vmem:[%s168 + $0x198] sm:$0xff]
      %v1099 = vld [vmem:[%s168 + $0x1a0] sm:$0xff]
      %v1100 = vld [vmem:[%s168 + $0x1a8] sm:$0xff]
      %v1101 = vld [vmem:[%s168 + $0x1b0] sm:$0xff]
      %v1102 = vld [vmem:[%s168 + $0x1b8] sm:$0xff]
      %v1103 = vld [vmem:[%s168 + $0x1c0] sm:$0xff]
      %v1104 = vld [vmem:[%s168 + $0x1c8] sm:$0xff]
      %v1105 = vld [vmem:[%s168 + $0x1d0] sm:$0xff]
      %v1106 = vld [vmem:[%s168 + $0x1d8] sm:$0xff]
      %v1107 = vld [vmem:[%s168 + $0x1e0] sm:$0xff]
      %v1108 = vld [vmem:[%s168 + $0x1e8] sm:$0xff]
      %v1109 = vld [vmem:[%s168 + $0x1f0] sm:$0xff]
      %v1110 = vld [vmem:[%s168 + $0x1f8] sm:$0xff]
      %v1111 = vpack.c.bf16 %v708, %v707
      %v1112 = vpack.c.bf16 %v710, %v709
      %v1113 = vpack.c.bf16 %v712, %v711
      %v1114 = vpack.c.bf16 %v714, %v713
      %v1115 = vpack.c.bf16 %v716, %v715
      %v1116 = vpack.c.bf16 %v718, %v717
      %v1117 = vpack.c.bf16 %v720, %v719
      %v1118 = vpack.c.bf16 %v722, %v721
      %v1119 = vpack.c.bf16 %v724, %v723
      %v1120 = vpack.c.bf16 %v726, %v725
      %v1121 = vpack.c.bf16 %v728, %v727
      %v1122 = vpack.c.bf16 %v730, %v729
      %v1123 = vpack.c.bf16 %v732, %v731
      %v1124 = vpack.c.bf16 %v734, %v733
      %v1125 = vpack.c.bf16 %v736, %v735
      %v1126 = vpack.c.bf16 %v738, %v737
      %v1127 = vpack.c.bf16 %v740, %v739
      %v1128 = vpack.c.bf16 %v742, %v741
      %v1129 = vpack.c.bf16 %v744, %v743
      %v1130 = vpack.c.bf16 %v746, %v745
      %v1131 = vpack.c.bf16 %v748, %v747
      %v1132 = vpack.c.bf16 %v750, %v749
      %v1133 = vpack.c.bf16 %v752, %v751
      %v1134 = vpack.c.bf16 %v754, %v753
      %v1135 = vpack.c.bf16 %v756, %v755
      %v1136 = vpack.c.bf16 %v758, %v757
      %v1137 = vpack.c.bf16 %v760, %v759
      %v1138 = vpack.c.bf16 %v762, %v761
      %v1139 = vpack.c.bf16 %v764, %v763
      %v1140 = vpack.c.bf16 %v766, %v765
      %v1141 = vpack.c.bf16 %v768, %v767
      %v1142 = vpack.c.bf16 %v770, %v769
      %1143 = vmatpush.bf16.msra.mxu0 %v1046
      %1144 = vmatpush.bf16.msra.mxu0 %v1045
      %1145 = vmatpush.bf16.msra.mxu0 %v1044
      %1146 = vmatpush.bf16.msra.mxu0 %v1043
      %1147 = vmatpush.bf16.msra.mxu0 %v1042
      %1148 = vmatpush.bf16.msra.mxu0 %v1041
      %1149 = vmatpush.bf16.msra.mxu0 %v1040
      %1150 = vmatpush.bf16.msra.mxu0 %v1039
      %1151 = vmatmul.bf16.gmra.mxu0 %v1111
      %v1152 = vpop.f32.mrf.mxu0
      %v1153 = vadd.f32 0.0, %v1152
      %v1154 = vpop.f32.mrf.mxu0
      %v1155 = vadd.f32 0.0, %v1154
      %1156 = vmatmul.bf16.gmra.mxu0 %v1112
      %v1157 = vpop.f32.mrf.mxu0
      %v1158 = vadd.f32 0.0, %v1157
      %v1159 = vpop.f32.mrf.mxu0
      %v1160 = vadd.f32 0.0, %v1159
      %1161 = vmatmul.bf16.gmra.mxu0 %v1113
      %v1162 = vpop.f32.mrf.mxu0
      %v1163 = vadd.f32 0.0, %v1162
      %v1164 = vpop.f32.mrf.mxu0
      %v1165 = vadd.f32 0.0, %v1164
      %1166 = vmatmul.bf16.gmra.mxu0 %v1114
      %v1167 = vpop.f32.mrf.mxu0
      %v1168 = vadd.f32 0.0, %v1167
      %v1169 = vpop.f32.mrf.mxu0
      %v1170 = vadd.f32 0.0, %v1169
      %1171 = vmatmul.bf16.gmra.mxu0 %v1115
      %v1172 = vpop.f32.mrf.mxu0
      %v1173 = vadd.f32 0.0, %v1172
      %v1174 = vpop.f32.mrf.mxu0
      %v1175 = vadd.f32 0.0, %v1174
      %1176 = vmatmul.bf16.gmra.mxu0 %v1116
      %v1177 = vpop.f32.mrf.mxu0
      %v1178 = vadd.f32 0.0, %v1177
      %v1179 = vpop.f32.mrf.mxu0
      %v1180 = vadd.f32 0.0, %v1179
      %1181 = vmatmul.bf16.gmra.mxu0 %v1117
      %v1182 = vpop.f32.mrf.mxu0
      %v1183 = vadd.f32 0.0, %v1182
      %v1184 = vpop.f32.mrf.mxu0
      %v1185 = vadd.f32 0.0, %v1184
      %1186 = vmatmul.bf16.gmra.mxu0 %v1118
      %v1187 = vpop.f32.mrf.mxu0
      %v1188 = vadd.f32 0.0, %v1187
      %v1189 = vpop.f32.mrf.mxu0
      %v1190 = vadd.f32 0.0, %v1189
      %1191 = vmatmul.bf16.gmra.mxu0 %v1119
      %v1192 = vpop.f32.mrf.mxu0
      %v1193 = vadd.f32 0.0, %v1192
      %v1194 = vpop.f32.mrf.mxu0
      %v1195 = vadd.f32 0.0, %v1194
      %1196 = vmatmul.bf16.gmra.mxu0 %v1120
      %v1197 = vpop.f32.mrf.mxu0
      %v1198 = vadd.f32 0.0, %v1197
      %v1199 = vpop.f32.mrf.mxu0
      %v1200 = vadd.f32 0.0, %v1199
      %1201 = vmatmul.bf16.gmra.mxu0 %v1121
      %v1202 = vpop.f32.mrf.mxu0
      %v1203 = vadd.f32 0.0, %v1202
      %v1204 = vpop.f32.mrf.mxu0
      %v1205 = vadd.f32 0.0, %v1204
      %1206 = vmatmul.bf16.gmra.mxu0 %v1122
      %v1207 = vpop.f32.mrf.mxu0
      %v1208 = vadd.f32 0.0, %v1207
      %v1209 = vpop.f32.mrf.mxu0
      %v1210 = vadd.f32 0.0, %v1209
      %1211 = vmatmul.bf16.gmra.mxu0 %v1123
      %v1212 = vpop.f32.mrf.mxu0
      %v1213 = vadd.f32 0.0, %v1212
      %v1214 = vpop.f32.mrf.mxu0
      %v1215 = vadd.f32 0.0, %v1214
      %1216 = vmatmul.bf16.gmra.mxu0 %v1124
      %v1217 = vpop.f32.mrf.mxu0
      %v1218 = vadd.f32 0.0, %v1217
      %v1219 = vpop.f32.mrf.mxu0
      %v1220 = vadd.f32 0.0, %v1219
      %1221 = vmatmul.bf16.gmra.mxu0 %v1125
      %v1222 = vpop.f32.mrf.mxu0
      %v1223 = vadd.f32 0.0, %v1222
      %v1224 = vpop.f32.mrf.mxu0
      %v1225 = vadd.f32 0.0, %v1224
      %1226 = vmatmul.bf16.gmra.mxu0 %v1126
      %v1227 = vpop.f32.mrf.mxu0
      %v1228 = vadd.f32 0.0, %v1227
      %v1229 = vpop.f32.mrf.mxu0
      %v1230 = vadd.f32 0.0, %v1229
      %1231 = vmatmul.bf16.gmra.mxu0 %v1127
      %v1232 = vpop.f32.mrf.mxu0
      %v1233 = vadd.f32 0.0, %v1232
      %v1234 = vpop.f32.mrf.mxu0
      %v1235 = vadd.f32 0.0, %v1234
      %1236 = vmatmul.bf16.gmra.mxu0 %v1128
      %v1237 = vpop.f32.mrf.mxu0
      %v1238 = vadd.f32 0.0, %v1237
      %v1239 = vpop.f32.mrf.mxu0
      %v1240 = vadd.f32 0.0, %v1239
      %1241 = vmatmul.bf16.gmra.mxu0 %v1129
      %v1242 = vpop.f32.mrf.mxu0
      %v1243 = vadd.f32 0.0, %v1242
      %v1244 = vpop.f32.mrf.mxu0
      %v1245 = vadd.f32 0.0, %v1244
      %1246 = vmatmul.bf16.gmra.mxu0 %v1130
      %v1247 = vpop.f32.mrf.mxu0
      %v1248 = vadd.f32 0.0, %v1247
      %v1249 = vpop.f32.mrf.mxu0
      %v1250 = vadd.f32 0.0, %v1249
      %1251 = vmatmul.bf16.gmra.mxu0 %v1131
      %v1252 = vpop.f32.mrf.mxu0
      %v1253 = vadd.f32 0.0, %v1252
      %v1254 = vpop.f32.mrf.mxu0
      %v1255 = vadd.f32 0.0, %v1254
      %1256 = vmatmul.bf16.gmra.mxu0 %v1132
      %v1257 = vpop.f32.mrf.mxu0
      %v1258 = vadd.f32 0.0, %v1257
      %v1259 = vpop.f32.mrf.mxu0
      %v1260 = vadd.f32 0.0, %v1259
      %1261 = vmatmul.bf16.gmra.mxu0 %v1133
      %v1262 = vpop.f32.mrf.mxu0
      %v1263 = vadd.f32 0.0, %v1262
      %v1264 = vpop.f32.mrf.mxu0
      %v1265 = vadd.f32 0.0, %v1264
      %1266 = vmatmul.bf16.gmra.mxu0 %v1134
      %v1267 = vpop.f32.mrf.mxu0
      %v1268 = vadd.f32 0.0, %v1267
      %v1269 = vpop.f32.mrf.mxu0
      %v1270 = vadd.f32 0.0, %v1269
      %1271 = vmatmul.bf16.gmra.mxu0 %v1135
      %v1272 = vpop.f32.mrf.mxu0
      %v1273 = vadd.f32 0.0, %v1272
      %v1274 = vpop.f32.mrf.mxu0
      %v1275 = vadd.f32 0.0, %v1274
      %1276 = vmatmul.bf16.gmra.mxu0 %v1136
      %v1277 = vpop.f32.mrf.mxu0
      %v1278 = vadd.f32 0.0, %v1277
      %v1279 = vpop.f32.mrf.mxu0
      %v1280 = vadd.f32 0.0, %v1279
      %1281 = vmatmul.bf16.gmra.mxu0 %v1137
      %v1282 = vpop.f32.mrf.mxu0
      %v1283 = vadd.f32 0.0, %v1282
      %v1284 = vpop.f32.mrf.mxu0
      %v1285 = vadd.f32 0.0, %v1284
      %1286 = vmatmul.bf16.gmra.mxu0 %v1138
      %v1287 = vpop.f32.mrf.mxu0
      %v1288 = vadd.f32 0.0, %v1287
      %v1289 = vpop.f32.mrf.mxu0
      %v1290 = vadd.f32 0.0, %v1289
      %1291 = vmatmul.bf16.gmra.mxu0 %v1139
      %v1292 = vpop.f32.mrf.mxu0
      %v1293 = vadd.f32 0.0, %v1292
      %v1294 = vpop.f32.mrf.mxu0
      %v1295 = vadd.f32 0.0, %v1294
      %1296 = vmatmul.bf16.gmra.mxu0 %v1140
      %v1297 = vpop.f32.mrf.mxu0
      %v1298 = vadd.f32 0.0, %v1297
      %v1299 = vpop.f32.mrf.mxu0
      %v1300 = vadd.f32 0.0, %v1299
      %1301 = vmatmul.bf16.gmra.mxu0 %v1141
      %v1302 = vpop.f32.mrf.mxu0
      %v1303 = vadd.f32 0.0, %v1302
      %v1304 = vpop.f32.mrf.mxu0
      %v1305 = vadd.f32 0.0, %v1304
      %1306 = vmatmul.bf16.gmra.mxu0 %v1142
      %v1307 = vpop.f32.mrf.mxu0
      %v1308 = vadd.f32 0.0, %v1307
      %v1309 = vpop.f32.mrf.mxu0
      %v1310 = vadd.f32 0.0, %v1309
      %1311 = vdwg.mxu0
      %v1312 = vadd.f32 %v1047, %v1153
      %v1313 = vadd.f32 %v1048, %v1155
      %v1314 = vadd.f32 %v1049, %v1158
      %v1315 = vadd.f32 %v1050, %v1160
      %v1316 = vadd.f32 %v1051, %v1163
      %v1317 = vadd.f32 %v1052, %v1165
      %v1318 = vadd.f32 %v1053, %v1168
      %v1319 = vadd.f32 %v1054, %v1170
      %v1320 = vadd.f32 %v1055, %v1173
      %v1321 = vadd.f32 %v1056, %v1175
      %v1322 = vadd.f32 %v1057, %v1178
      %v1323 = vadd.f32 %v1058, %v1180
      %v1324 = vadd.f32 %v1059, %v1183
      %v1325 = vadd.f32 %v1060, %v1185
      %v1326 = vadd.f32 %v1061, %v1188
      %v1327 = vadd.f32 %v1062, %v1190
      %v1328 = vadd.f32 %v1063, %v1193
      %v1329 = vadd.f32 %v1064, %v1195
      %v1330 = vadd.f32 %v1065, %v1198
      %v1331 = vadd.f32 %v1066, %v1200
      %v1332 = vadd.f32 %v1067, %v1203
      %v1333 = vadd.f32 %v1068, %v1205
      %v1334 = vadd.f32 %v1069, %v1208
      %v1335 = vadd.f32 %v1070, %v1210
      %v1336 = vadd.f32 %v1071, %v1213
      %v1337 = vadd.f32 %v1072, %v1215
      %v1338 = vadd.f32 %v1073, %v1218
      %v1339 = vadd.f32 %v1074, %v1220
      %v1340 = vadd.f32 %v1075, %v1223
      %v1341 = vadd.f32 %v1076, %v1225
      %v1342 = vadd.f32 %v1077, %v1228
      %v1343 = vadd.f32 %v1078, %v1230
      %v1344 = vadd.f32 %v1079, %v1233
      %v1345 = vadd.f32 %v1080, %v1235
      %v1346 = vadd.f32 %v1081, %v1238
      %v1347 = vadd.f32 %v1082, %v1240
      %v1348 = vadd.f32 %v1083, %v1243
      %v1349 = vadd.f32 %v1084, %v1245
      %v1350 = vadd.f32 %v1085, %v1248
      %v1351 = vadd.f32 %v1086, %v1250
      %v1352 = vadd.f32 %v1087, %v1253
      %v1353 = vadd.f32 %v1088, %v1255
      %v1354 = vadd.f32 %v1089, %v1258
      %v1355 = vadd.f32 %v1090, %v1260
      %v1356 = vadd.f32 %v1091, %v1263
      %v1357 = vadd.f32 %v1092, %v1265
      %v1358 = vadd.f32 %v1093, %v1268
      %v1359 = vadd.f32 %v1094, %v1270
      %v1360 = vadd.f32 %v1095, %v1273
      %v1361 = vadd.f32 %v1096, %v1275
      %v1362 = vadd.f32 %v1097, %v1278
      %v1363 = vadd.f32 %v1098, %v1280
      %v1364 = vadd.f32 %v1099, %v1283
      %v1365 = vadd.f32 %v1100, %v1285
      %v1366 = vadd.f32 %v1101, %v1288
      %v1367 = vadd.f32 %v1102, %v1290
      %v1368 = vadd.f32 %v1103, %v1293
      %v1369 = vadd.f32 %v1104, %v1295
      %v1370 = vadd.f32 %v1105, %v1298
      %v1371 = vadd.f32 %v1106, %v1300
      %v1372 = vadd.f32 %v1107, %v1303
      %v1373 = vadd.f32 %v1108, %v1305
      %v1374 = vadd.f32 %v1109, %v1308
      %v1375 = vadd.f32 %v1110, %v1310
      %vm1376 = vcmask 31744
      %1377 = vst.msk [vmem:[%s168] sm:$0xff] %vm1376, %v1312
      %1378 = vst.msk [vmem:[%s168 + $0x8] sm:$0xff] %vm1376, %v1313
      %1379 = vst.msk [vmem:[%s168 + $0x10] sm:$0xff] %vm1376, %v1314
      %1380 = vst.msk [vmem:[%s168 + $0x18] sm:$0xff] %vm1376, %v1315
      %1381 = vst.msk [vmem:[%s168 + $0x20] sm:$0xff] %vm1376, %v1316
      %1382 = vst.msk [vmem:[%s168 + $0x28] sm:$0xff] %vm1376, %v1317
      %1383 = vst.msk [vmem:[%s168 + $0x30] sm:$0xff] %vm1376, %v1318
      %1384 = vst.msk [vmem:[%s168 + $0x38] sm:$0xff] %vm1376, %v1319
      %1385 = vst.msk [vmem:[%s168 + $0x40] sm:$0xff] %vm1376, %v1320
      %1386 = vst.msk [vmem:[%s168 + $0x48] sm:$0xff] %vm1376, %v1321
      %1387 = vst.msk [vmem:[%s168 + $0x50] sm:$0xff] %vm1376, %v1322
      %1388 = vst.msk [vmem:[%s168 + $0x58] sm:$0xff] %vm1376, %v1323
      %1389 = vst.msk [vmem:[%s168 + $0x60] sm:$0xff] %vm1376, %v1324
      %1390 = vst.msk [vmem:[%s168 + $0x68] sm:$0xff] %vm1376, %v1325
      %1391 = vst.msk [vmem:[%s168 + $0x70] sm:$0xff] %vm1376, %v1326
      %1392 = vst.msk [vmem:[%s168 + $0x78] sm:$0xff] %vm1376, %v1327
      %1393 = vst.msk [vmem:[%s168 + $0x80] sm:$0xff] %vm1376, %v1328
      %1394 = vst.msk [vmem:[%s168 + $0x88] sm:$0xff] %vm1376, %v1329
      %1395 = vst.msk [vmem:[%s168 + $0x90] sm:$0xff] %vm1376, %v1330
      %1396 = vst.msk [vmem:[%s168 + $0x98] sm:$0xff] %vm1376, %v1331
      %1397 = vst.msk [vmem:[%s168 + $0xa0] sm:$0xff] %vm1376, %v1332
      %1398 = vst.msk [vmem:[%s168 + $0xa8] sm:$0xff] %vm1376, %v1333
      %1399 = vst.msk [vmem:[%s168 + $0xb0] sm:$0xff] %vm1376, %v1334
      %1400 = vst.msk [vmem:[%s168 + $0xb8] sm:$0xff] %vm1376, %v1335
      %1401 = vst.msk [vmem:[%s168 + $0xc0] sm:$0xff] %vm1376, %v1336
      %1402 = vst.msk [vmem:[%s168 + $0xc8] sm:$0xff] %vm1376, %v1337
      %1403 = vst.msk [vmem:[%s168 + $0xd0] sm:$0xff] %vm1376, %v1338
      %1404 = vst.msk [vmem:[%s168 + $0xd8] sm:$0xff] %vm1376, %v1339
      %1405 = vst.msk [vmem:[%s168 + $0xe0] sm:$0xff] %vm1376, %v1340
      %1406 = vst.msk [vmem:[%s168 + $0xe8] sm:$0xff] %vm1376, %v1341
      %1407 = vst.msk [vmem:[%s168 + $0xf0] sm:$0xff] %vm1376, %v1342
      %1408 = vst.msk [vmem:[%s168 + $0xf8] sm:$0xff] %vm1376, %v1343
      %1409 = vst.msk [vmem:[%s168 + $0x100] sm:$0xff] %vm1376, %v1344
      %1410 = vst.msk [vmem:[%s168 + $0x108] sm:$0xff] %vm1376, %v1345
      %1411 = vst.msk [vmem:[%s168 + $0x110] sm:$0xff] %vm1376, %v1346
      %1412 = vst.msk [vmem:[%s168 + $0x118] sm:$0xff] %vm1376, %v1347
      %1413 = vst.msk [vmem:[%s168 + $0x120] sm:$0xff] %vm1376, %v1348
      %1414 = vst.msk [vmem:[%s168 + $0x128] sm:$0xff] %vm1376, %v1349
      %1415 = vst.msk [vmem:[%s168 + $0x130] sm:$0xff] %vm1376, %v1350
      %1416 = vst.msk [vmem:[%s168 + $0x138] sm:$0xff] %vm1376, %v1351
      %1417 = vst.msk [vmem:[%s168 + $0x140] sm:$0xff] %vm1376, %v1352
      %1418 = vst.msk [vmem:[%s168 + $0x148] sm:$0xff] %vm1376, %v1353
      %1419 = vst.msk [vmem:[%s168 + $0x150] sm:$0xff] %vm1376, %v1354
      %1420 = vst.msk [vmem:[%s168 + $0x158] sm:$0xff] %vm1376, %v1355
      %1421 = vst.msk [vmem:[%s168 + $0x160] sm:$0xff] %vm1376, %v1356
      %1422 = vst.msk [vmem:[%s168 + $0x168] sm:$0xff] %vm1376, %v1357
      %1423 = vst.msk [vmem:[%s168 + $0x170] sm:$0xff] %vm1376, %v1358
      %1424 = vst.msk [vmem:[%s168 + $0x178] sm:$0xff] %vm1376, %v1359
      %1425 = vst.msk [vmem:[%s168 + $0x180] sm:$0xff] %vm1376, %v1360
      %1426 = vst.msk [vmem:[%s168 + $0x188] sm:$0xff] %vm1376, %v1361
      %1427 = vst.msk [vmem:[%s168 + $0x190] sm:$0xff] %vm1376, %v1362
      %1428 = vst.msk [vmem:[%s168 + $0x198] sm:$0xff] %vm1376, %v1363
      %1429 = vst.msk [vmem:[%s168 + $0x1a0] sm:$0xff] %vm1376, %v1364
      %1430 = vst.msk [vmem:[%s168 + $0x1a8] sm:$0xff] %vm1376, %v1365
      %1431 = vst.msk [vmem:[%s168 + $0x1b0] sm:$0xff] %vm1376, %v1366
      %1432 = vst.msk [vmem:[%s168 + $0x1b8] sm:$0xff] %vm1376, %v1367
      %1433 = vst.msk [vmem:[%s168 + $0x1c0] sm:$0xff] %vm1376, %v1368
      %1434 = vst.msk [vmem:[%s168 + $0x1c8] sm:$0xff] %vm1376, %v1369
      %1435 = vst.msk [vmem:[%s168 + $0x1d0] sm:$0xff] %vm1376, %v1370
      %1436 = vst.msk [vmem:[%s168 + $0x1d8] sm:$0xff] %vm1376, %v1371
      %1437 = vst.msk [vmem:[%s168 + $0x1e0] sm:$0xff] %vm1376, %v1372
      %1438 = vst.msk [vmem:[%s168 + $0x1e8] sm:$0xff] %vm1376, %v1373
      %1439 = vst.msk [vmem:[%s168 + $0x1f0] sm:$0xff] %vm1376, %v1374
      %1440 = vst.msk [vmem:[%s168 + $0x1f8] sm:$0xff] %vm1376, %v1375
      %p1441 = scmp.lt.s32.totalorder %s26, 1
      %s1442 = scalar_select %p1441, %s26, 1
      %s1443 = smul.addr %s1442, 64
      %s1444 = smul.addr %s1443, 8
      %s1445 = scalar_lea.vmem %s3, %s1444
      // Predicated region
      $region33: #{tpu_custom_call.1} parent=27 // pred_check
        %p1446 = pneg %p101
      $region34: #{tpu_custom_call.1} parent=27 // pred_check_branch
        %1448 = sbr.rel (%p1446) target = $region36
      $region35: #{tpu_custom_call.1} parent=27 // pred_region
        _
      $region36: #{tpu_custom_call.1} parent=27 // pred_fallthru
        _
    $region28: #{tpu_custom_call.1} parent=5 // pred_fallthru
      _
    %p1449 = scmp.le.s32.totalorder 2, %s17
    // Predicated region
    $region37: #{tpu_custom_call.1} parent=5 // pred_check
      %p1450 = pneg %p1449
    $region38: #{tpu_custom_call.1} parent=5 // pred_check_branch
      %1452 = sbr.rel (%p1450) target = $region40
    $region39: #{tpu_custom_call.1} parent=5 // pred_region
      %s1453 = ssub.s32 %s17, 2
      // Predicated region
      $region41: #{tpu_custom_call.1} parent=39 // pred_check
        %p1454 = pneg %p107
      $region42: #{tpu_custom_call.1} parent=39 // pred_check_branch
        %1456 = sbr.rel (%p1454) target = $region44
      $region43: #{tpu_custom_call.1} parent=39 // pred_region
        %p1457 = scmp.lt.s32.totalorder %s28, 1
        %s1458 = scalar_select %p1457, %s28, 1
        %s1459 = smul.addr %s1458, 64
        %s1460 = smul.addr %s1459, 8
        %s1461 = scalar_lea.vmem %s3, %s1460
      $region44: #{tpu_custom_call.1} parent=39 // pred_fallthru
        _
    $region40: #{tpu_custom_call.1} parent=5 // pred_fallthru
      _
  $region6: #{tpu_custom_call.1} parent=0 // loop_footer
    %s21 = sadd.s32 1, %s17
  $region7: #{tpu_custom_call.1} parent=0 // loop_footer_branch
    %16 = sbr.rel target = $region3
  $region8: #{tpu_custom_call.1} parent=0 // loop_exit
    _

</llo_original>
